<compile_context>
chip_gen: v6e
topology: v6e:2x2x1
jax: 0.10.0
libtpu: 0.0.40
codegen_flags: <defaults>
</compile_context>

<pallas_src>
import math

import jax
import jax.numpy as jnp
from jax.experimental import pallas as pl
from jax.experimental.pallas import tpu as pltpu

_H = 16       # hidden width of both MLPs
_LANE = 128   # lane width for dense stores


# ----------------------------- kernels ------------------------------------ #

def _mlp1(agg, b1, w2p, b2p):
    """agg = A' @ (x W1); returns h padded to 128 lanes (zeros beyond col 16)."""
    f32 = jnp.float32
    h1 = jnp.maximum(agg + b1, 0.0)
    h = jnp.dot(h1, w2p, preferred_element_type=f32) + b2p
    return jnp.maximum(h, 0.0)


def _mlp2_logsoftmax(agg, w3p, b3, w4p, b4p):
    """agg = A' @ h (128-wide, zero beyond col 16); returns padded log-probs."""
    f32 = jnp.float32
    z = jnp.maximum(jnp.dot(agg, w3p, preferred_element_type=f32) + b3, 0.0)
    logits = jnp.dot(z, w4p, preferred_element_type=f32) + b4p
    # Padded class lanes carry bias -1e30 -> exp underflows to 0 exactly, so
    # the softmax is over the real classes only.  Numerically stable form.
    m = jnp.max(logits, axis=1, keepdims=True)
    s = logits - m
    lse = jnp.log(jnp.sum(jnp.exp(s), axis=1, keepdims=True))
    return s - lse


def gin_conv1_kernel(a_ref, xw1_ref, b1_ref, w2p_ref, b2p_ref, h_ref):
    """Streamed pass 1: (tm, N) int8 A' row tile -> (tm, 128) bf16 h tile."""
    a = a_ref[...].astype(jnp.bfloat16)
    agg = jnp.dot(a, xw1_ref[...], preferred_element_type=jnp.float32)
    h = _mlp1(agg, b1_ref[...], w2p_ref[...], b2p_ref[...])
    # F.relu after conv1 is idempotent on the already-ReLU'd h -> omitted.
    h_ref[...] = h.astype(h_ref.dtype)


def gin_conv2_kernel(a_ref, h_ref, w3p_ref, b3_ref, w4p_ref, b4p_ref, out_ref):
    """Streamed pass 2: (tm, N) int8 A' row tile -> (tm, Cp) f32 log-probs."""
    a = a_ref[...].astype(jnp.bfloat16)
    agg = jnp.dot(a, h_ref[...], preferred_element_type=jnp.float32)
    out = _mlp2_logsoftmax(agg, w3p_ref[...], b3_ref[...], w4p_ref[...], b4p_ref[...])
    out_ref[...] = out.astype(out_ref.dtype)


def gin_fused_kernel(a_ref, xw1_ref, b1_ref, w2p_ref, b2p_ref,
                     w3p_ref, b3_ref, w4p_ref, b4p_ref, out_ref):
    """Fused path: A' fully VMEM-resident; both convs + log_softmax in one call."""
    a = a_ref[...].astype(jnp.bfloat16)                       # (n, n) bf16
    agg1 = jnp.dot(a, xw1_ref[...], preferred_element_type=jnp.float32)
    h = _mlp1(agg1, b1_ref[...], w2p_ref[...], b2p_ref[...])  # (n, 128)
    agg2 = jnp.dot(a, h.astype(jnp.bfloat16), preferred_element_type=jnp.float32)
    out = _mlp2_logsoftmax(agg2, w3p_ref[...], b3_ref[...], w4p_ref[...], b4p_ref[...])
    out_ref[...] = out.astype(out_ref.dtype)


# ----------------------------- helpers ------------------------------------ #

def _round_up(x, m):
    return ((x + m - 1) // m) * m


def _vmem_capacity_bytes():
    """Per-core VMEM capacity; conservative 64 MiB (v7x) fallback."""
    try:
        info = pltpu.get_tpu_info()
        for name in ("vmem_capacity_bytes", "vmem_bytes", "vmem_size_bytes"):
            v = getattr(info, name, None)
            if v:
                return int(v)
    except Exception:
        pass
    return 64 << 20


def _choose_row_tile(n_pad, budget_bytes, tm_cap=256):
    """Row tile (multiple of 128, capped at 256 to avoid vreg spills) whose
    double-buffered int8 A' tile fits the budget."""
    if n_pad <= 128:
        return 128
    tm = 128
    while tm * 2 <= min(n_pad, tm_cap) and 2 * (tm * 2) * n_pad <= budget_bytes:
        tm *= 2
    return tm


def _vmem_limit_streamed(tm, n_pad, cp, vmem_cap):
    a_tiles = 2 * tm * n_pad            # double-buffered int8 A' row tiles
    a_bf16 = 2 * tm * n_pad * 2         # in-kernel bf16 upcast (generous)
    resident = n_pad * _LANE * 2 + n_pad * _H * 2   # h (pass2) + xW1 (pass1)
    out_tiles = 2 * tm * max(cp, _LANE) * 4
    total = a_tiles + a_bf16 + resident + out_tiles + (1 << 20) + (4 << 20)
    return int(min(max(total, 16 << 20), int(vmem_cap * 0.70)))


def _vmem_limit_fused(n_pad, cp, vmem_cap):
    a = n_pad * n_pad                   # int8 A' resident
    a_bf = 2 * n_pad * n_pad            # bf16 upcast
    inter = 6 * n_pad * _LANE * 4       # intermediates (generous)
    out = n_pad * max(cp, _LANE) * 4
    total = a + a_bf + inter + out + (4 << 20)
    return int(min(max(total, 16 << 20), int(vmem_cap * 0.75)))


def _linear_params(key, fan_in, fan_out):
    """PyTorch nn.Linear default init; weight stored pre-transposed (in, out)."""
    kw, kb = jax.random.split(key)
    bound = 1.0 / math.sqrt(fan_in)
    w = jax.random.uniform(kw, (fan_in, fan_out), jnp.float32, -bound, bound)
    b = jax.random.uniform(kb, (1, fan_out), jnp.float32, -bound, bound)
    return w, b


def build_params(key, num_features, num_classes):
    dims = [(num_features, _H), (_H, _H), (_H, _H), (_H, num_classes)]
    keys = jax.random.split(key, len(dims))
    params = []
    for k, (fi, fo) in zip(keys, dims):
        params.extend(_linear_params(k, fi, fo))
    return params


# ----------------------------- forward ------------------------------------ #

def gin_net_pascalvoc(x, edge_index, params, *, force_streamed=False):
    """Forward pass of GINNet_PascalVOC.  x: (N, F) f32, edge_index: (2, E) i32.
    Returns (N, num_classes) f32 per-node log-probabilities."""
    w1, b1, w2, b2, w3, b3, w4, b4 = params
    num_nodes, _ = x.shape
    num_classes = w4.shape[1]
    c_pad = _round_up(max(num_classes, 1), _LANE)

    vmem_cap = _vmem_capacity_bytes()
    n_pad = _round_up(max(num_nodes, 8), _LANE)

    # Fused path when int8 A' + its bf16 upcast comfortably fit VMEM.
    fused = (not force_streamed) and (3 * n_pad * n_pad + (4 << 20) <= vmem_cap // 4)

    if fused:
        tm, n_tiles = n_pad, 1
    else:
        tile_budget = (8 << 20) if vmem_cap <= (64 << 20) else (16 << 20)
        tm = _choose_row_tile(n_pad, tile_budget)
        n_pad = _round_up(n_pad, 2 * tm)   # even tile count (v7x two TensorCores)
        n_tiles = n_pad // tm

    # ---- A' = A + I, built directly in int8 (single scatter, no extra passes).
    # NOTE: exact only while per-entry multiplicity (+1 self loop) <= 127.
    src = edge_index[0].astype(jnp.int32)
    dst = edge_index[1].astype(jnp.int32)
    diag = jnp.arange(n_pad, dtype=jnp.int32)
    rows = jnp.concatenate([dst, diag])
    cols = jnp.concatenate([src, diag])
    adj = jnp.zeros((n_pad, n_pad), jnp.int8).at[rows, cols].add(
        jnp.ones(rows.shape, jnp.int8))

    # ---- Pre-fold W1 into x: A'(x W1) == (A' x) W1.  O(N*F) work, done once.
    xw1 = x.astype(jnp.float32) @ w1                            # (N, 16) f32
    xw1_pad = jnp.zeros((n_pad, _H), jnp.float32).at[:num_nodes].set(xw1)
    xw1_pad = xw1_pad.astype(jnp.bfloat16)

    # ---- Lane-dense weight/bias padding.
    w2p = jnp.zeros((_H, _LANE), jnp.float32).at[:, :_H].set(w2)
    b2p = jnp.zeros((1, _LANE), jnp.float32).at[:, :_H].set(b2)
    w3p = jnp.zeros((_LANE, _H), jnp.float32).at[:_H, :].set(w3)
    w4p = jnp.zeros((_H, c_pad), jnp.float32).at[:, :num_classes].set(w4)
    b4p = jnp.full((1, c_pad), -1e30, jnp.float32).at[:, :num_classes].set(b4)

    if fused:
        out = pl.pallas_call(
            gin_fused_kernel,
            out_shape=jax.ShapeDtypeStruct((n_pad, c_pad), jnp.float32),
            compiler_params=pltpu.CompilerParams(
                vmem_limit_bytes=_vmem_limit_fused(n_pad, c_pad, vmem_cap)),
        )(adj, xw1_pad, b1, w2p, b2p, w3p, b3, w4p, b4p)
        return out[:num_nodes, :num_classes]

    # ---------------- streamed fallback (large graphs) ---------------- #
    cparams = pltpu.CompilerParams(
        dimension_semantics=("parallel",),
        vmem_limit_bytes=_vmem_limit_streamed(tm, n_pad, c_pad, vmem_cap),
    )
    grid = (n_tiles,)

    # pass 1: stream int8 A' row tiles, produce lane-dense h (N, 128) bf16.
    h = pl.pallas_call(
        gin_conv1_kernel,
        out_shape=jax.ShapeDtypeStruct((n_pad, _LANE), jnp.bfloat16),
        grid=grid,
        in_specs=[
            pl.BlockSpec((tm, n_pad), lambda i: (i, 0)),        # A' row tile (int8)
            pl.BlockSpec((n_pad, _H), lambda i: (0, 0)),        # xW1 (resident)
            pl.BlockSpec((1, _H), lambda i: (0, 0)),            # b1
            pl.BlockSpec((_H, _LANE), lambda i: (0, 0)),        # W2 (padded)
            pl.BlockSpec((1, _LANE), lambda i: (0, 0)),         # b2 (padded)
        ],
        out_specs=pl.BlockSpec((tm, _LANE), lambda i: (i, 0)),
        compiler_params=cparams,
    )(adj, xw1_pad, b1, w2p, b2p)

    # pass 2: stream A' again, produce lane-dense log-probs (N, Cp) f32.
    out = pl.pallas_call(
        gin_conv2_kernel,
        out_shape=jax.ShapeDtypeStruct((n_pad, c_pad), jnp.float32),
        grid=grid,
        in_specs=[
            pl.BlockSpec((tm, n_pad), lambda i: (i, 0)),        # A' row tile (int8)
            pl.BlockSpec((n_pad, _LANE), lambda i: (0, 0)),     # h (resident)
            pl.BlockSpec((_LANE, _H), lambda i: (0, 0)),        # W3 (padded)
            pl.BlockSpec((1, _H), lambda i: (0, 0)),            # b3
            pl.BlockSpec((_H, c_pad), lambda i: (0, 0)),        # W4 (padded)
            pl.BlockSpec((1, c_pad), lambda i: (0, 0)),         # b4 (-1e30 pad)
        ],
        out_specs=pl.BlockSpec((tm, c_pad), lambda i: (i, 0)),
        compiler_params=cparams,
    )(adj, h, w3p, b3, w4p, b4p)

    return out[:num_nodes, :num_classes]


# ------------------------------- demo -------------------------------------- #

if __name__ == "__main__":
    key = jax.random.PRNGKey(0)

    num_nodes = 300       # PascalVOC-SP-scale graph -> fused path
    num_features = 14     # superpixel node features
    num_classes = 21      # PascalVOC classes

    kx, kp = jax.random.split(key)
    x = jax.random.uniform(kx, (num_nodes, num_features), jnp.float32)

    # Deterministic graph: bidirected ring + a chord every 7 nodes.
    src, dst = [], []
    for i in range(num_nodes):
        j = (i + 1) % num_nodes
        src += [i, j]
        dst += [j, i]
    for i in range(0, num_nodes, 7):
        j = (i + num_nodes // 2) % num_nodes
        src += [i, j]
        dst += [j, i]
    edge_index = jnp.array([src, dst], dtype=jnp.int32)

    params = build_params(kp, num_features, num_classes)

    # Fused (A'-resident) path.
    out = gin_net_pascalvoc(x, edge_index, params)
    out = jax.block_until_ready(out)

    assert out.shape == (num_nodes, num_classes)
    assert bool(jnp.all(jnp.isfinite(out)))
    row_sums = jnp.sum(jnp.exp(out), axis=1)
    assert bool(jnp.allclose(row_sums, 1.0, atol=1e-3))

    # Streamed (row-tile) path on the same graph; must agree with fused.
    out_s = gin_net_pascalvoc(x, edge_index, params, force_streamed=True)
    out_s = jax.block_until_ready(out_s)
    assert out_s.shape == (num_nodes, num_classes)
    assert bool(jnp.all(jnp.isfinite(out_s)))
    assert bool(jnp.allclose(jnp.sum(jnp.exp(out_s), axis=1), 1.0, atol=1e-3))
    assert bool(jnp.allclose(out, out_s, atol=3e-2, rtol=3e-2))

    print("KERNEL_OK")
</pallas_src>

<mosaic_0001>
module attributes {stable_mosaic.version = 11 : i64} {
  func.func @gin_fused_kernel(%arg0: memref<384x384xi8, #tpu.memory_space<vmem>>, %arg1: memref<384x16xbf16, #tpu.memory_space<vmem>>, %arg2: memref<1x16xf32, #tpu.memory_space<vmem>>, %arg3: memref<16x128xf32, #tpu.memory_space<vmem>>, %arg4: memref<1x128xf32, #tpu.memory_space<vmem>>, %arg5: memref<128x16xf32, #tpu.memory_space<vmem>>, %arg6: memref<1x16xf32, #tpu.memory_space<vmem>>, %arg7: memref<16x128xf32, #tpu.memory_space<vmem>>, %arg8: memref<1x128xf32, #tpu.memory_space<vmem>>, %arg9: memref<384x128xf32, #tpu.memory_space<vmem>>) attributes {dimension_semantics = [], scalar_prefetch = 0 : i64, scratch_operands = 0 : i64, tpu.core_type = #tpu.core_type<tc>} {
    %c0 = arith.constant 0 : index
    %c0_0 = arith.constant 0 : index
    %0 = vector.load %arg0[%c0, %c0_0] : memref<384x384xi8, #tpu.memory_space<vmem>>, vector<384x384xi8>
    %1 = arith.sitofp %0 : vector<384x384xi8> to vector<384x384xbf16>
    %c0_1 = arith.constant 0 : index
    %c0_2 = arith.constant 0 : index
    %2 = vector.load %arg1[%c0_1, %c0_2] : memref<384x16xbf16, #tpu.memory_space<vmem>>, vector<384x16xbf16>
    %cst = arith.constant dense<0.000000e+00> : vector<384x16xf32>
    %3 = tpu.matmul %1, %2, %cst {dimension_numbers = #tpu.dot_dimension_numbers<[1], [0], [0], [1], [0, 0, 1, 1], [], []>} : vector<384x384xbf16>, vector<384x16xbf16>, vector<384x16xf32> -> vector<384x16xf32>
    %c0_3 = arith.constant 0 : index
    %c0_4 = arith.constant 0 : index
    %4 = vector.load %arg2[%c0_3, %c0_4] : memref<1x16xf32, #tpu.memory_space<vmem>>, vector<1x16xf32>
    %c0_5 = arith.constant 0 : index
    %c0_6 = arith.constant 0 : index
    %5 = vector.load %arg3[%c0_5, %c0_6] : memref<16x128xf32, #tpu.memory_space<vmem>>, vector<16x128xf32>
    %c0_7 = arith.constant 0 : index
    %c0_8 = arith.constant 0 : index
    %6 = vector.load %arg4[%c0_7, %c0_8] : memref<1x128xf32, #tpu.memory_space<vmem>>, vector<1x128xf32>
    %7 = vector.broadcast %4 : vector<1x16xf32> to vector<384x16xf32>
    %8 = arith.addf %3, %7 : vector<384x16xf32>
    %cst_9 = arith.constant 0.000000e+00 : f32
    %9 = vector.broadcast %cst_9 : f32 to vector<384x16xf32>
    %10 = arith.maximumf %8, %9 : vector<384x16xf32>
    %cst_10 = arith.constant dense<0.000000e+00> : vector<384x128xf32>
    %11 = tpu.matmul %10, %5, %cst_10 {dimension_numbers = #tpu.dot_dimension_numbers<[1], [0], [0], [1], [0, 0, 1, 1], [], []>} : vector<384x16xf32>, vector<16x128xf32>, vector<384x128xf32> -> vector<384x128xf32>
    %12 = vector.broadcast %6 : vector<1x128xf32> to vector<384x128xf32>
    %13 = arith.addf %11, %12 : vector<384x128xf32>
    %cst_11 = arith.constant 0.000000e+00 : f32
    %14 = vector.broadcast %cst_11 : f32 to vector<384x128xf32>
    %15 = arith.maximumf %13, %14 : vector<384x128xf32>
    %16 = arith.truncf %15 : vector<384x128xf32> to vector<384x128xbf16>
    %cst_12 = arith.constant dense<0.000000e+00> : vector<384x128xf32>
    %17 = tpu.matmul %1, %16, %cst_12 {dimension_numbers = #tpu.dot_dimension_numbers<[1], [0], [0], [1], [0, 0, 1, 1], [], []>} : vector<384x384xbf16>, vector<384x128xbf16>, vector<384x128xf32> -> vector<384x128xf32>
    %c0_13 = arith.constant 0 : index
    %c0_14 = arith.constant 0 : index
    %18 = vector.load %arg5[%c0_13, %c0_14] : memref<128x16xf32, #tpu.memory_space<vmem>>, vector<128x16xf32>
    %c0_15 = arith.constant 0 : index
    %c0_16 = arith.constant 0 : index
    %19 = vector.load %arg6[%c0_15, %c0_16] : memref<1x16xf32, #tpu.memory_space<vmem>>, vector<1x16xf32>
    %c0_17 = arith.constant 0 : index
    %c0_18 = arith.constant 0 : index
    %20 = vector.load %arg7[%c0_17, %c0_18] : memref<16x128xf32, #tpu.memory_space<vmem>>, vector<16x128xf32>
    %c0_19 = arith.constant 0 : index
    %c0_20 = arith.constant 0 : index
    %21 = vector.load %arg8[%c0_19, %c0_20] : memref<1x128xf32, #tpu.memory_space<vmem>>, vector<1x128xf32>
    %cst_21 = arith.constant dense<0.000000e+00> : vector<384x16xf32>
    %22 = tpu.matmul %17, %18, %cst_21 {dimension_numbers = #tpu.dot_dimension_numbers<[1], [0], [0], [1], [0, 0, 1, 1], [], []>} : vector<384x128xf32>, vector<128x16xf32>, vector<384x16xf32> -> vector<384x16xf32>
    %23 = vector.broadcast %19 : vector<1x16xf32> to vector<384x16xf32>
    %24 = arith.addf %22, %23 : vector<384x16xf32>
    %cst_22 = arith.constant 0.000000e+00 : f32
    %25 = vector.broadcast %cst_22 : f32 to vector<384x16xf32>
    %26 = arith.maximumf %24, %25 : vector<384x16xf32>
    %cst_23 = arith.constant dense<0.000000e+00> : vector<384x128xf32>
    %27 = tpu.matmul %26, %20, %cst_23 {dimension_numbers = #tpu.dot_dimension_numbers<[1], [0], [0], [1], [0, 0, 1, 1], [], []>} : vector<384x16xf32>, vector<16x128xf32>, vector<384x128xf32> -> vector<384x128xf32>
    %28 = vector.broadcast %21 : vector<1x128xf32> to vector<384x128xf32>
    %29 = arith.addf %27, %28 : vector<384x128xf32>
    %cst_24 = arith.constant dense<0xFF800000> : vector<384xf32>
    %30 = vector.multi_reduction <maximumf>, %29, %cst_24 [1] : vector<384x128xf32> to vector<384xf32>
    %31 = vector.shape_cast %30 : vector<384xf32> to vector<384x1xf32>
    %32 = vector.broadcast %31 : vector<384x1xf32> to vector<384x128xf32>
    %33 = arith.subf %29, %32 : vector<384x128xf32>
    %34 = math.exp %33 : vector<384x128xf32>
    %cst_25 = arith.constant dense<0.000000e+00> : vector<384xf32>
    %35 = vector.multi_reduction <add>, %34, %cst_25 [1] : vector<384x128xf32> to vector<384xf32>
    %36 = vector.shape_cast %35 : vector<384xf32> to vector<384x1xf32>
    %37 = math.log %36 : vector<384x1xf32>
    %38 = vector.broadcast %37 : vector<384x1xf32> to vector<384x128xf32>
    %39 = arith.subf %33, %38 : vector<384x128xf32>
    %c0_26 = arith.constant 0 : index
    %c0_27 = arith.constant 0 : index
    %40 = vector.load %arg9[%c0_26, %c0_27] : memref<384x128xf32, #tpu.memory_space<vmem>>, vector<384x128xf32>
    tpu.vector_store %arg9[%c0_26, %c0_27], %39 {strides = array<i32>} : memref<384x128xf32, #tpu.memory_space<vmem>>, vector<384x128xf32>,
    return
  }
}

</mosaic_0001>

<llo_original>
// kernel: tpu_custom_call.1
$region0: #{tpu_custom_call.1}
  #allocation0 [shape = 'u32[]', space=smem, size = 0x4, offset = 0x4, fixed_abs, tag = 'smem constant byte address 0x4 - core index']
  #allocation1 [shape = 'u32[144,128]{1,0:T(1,128)}', space=vmem, size = 0x12000, scoped, tag = 'internal scratch']
  %s0 = inlined_call_operand.vmem [shape: s8[384,384], index: 0, kind: input, shape index: {}]
  %s1 = inlined_call_operand.vmem [shape: bf16[384,16], index: 1, kind: input, shape index: {}]
  %s2 = inlined_call_operand.vmem [shape: f32[1,16], index: 2, kind: input, shape index: {}]
  %s3 = inlined_call_operand.vmem [shape: f32[16,128], index: 3, kind: input, shape index: {}]
  %s4 = inlined_call_operand.vmem [shape: f32[1,128], index: 4, kind: input, shape index: {}]
  %s5 = inlined_call_operand.vmem [shape: f32[128,16], index: 5, kind: input, shape index: {}]
  %s6 = inlined_call_operand.vmem [shape: f32[1,16], index: 6, kind: input, shape index: {}]
  %s7 = inlined_call_operand.vmem [shape: f32[16,128], index: 7, kind: input, shape index: {}]
  %s8 = inlined_call_operand.vmem [shape: f32[1,128], index: 8, kind: input, shape index: {}]
  %s9 = inlined_call_operand.hbm [shape: f32[384,128], index: 9, kind: output, shape index: {}]
  %s10 = sld [smem:[#allocation0]]
  $region46: #{tpu_custom_call.1} parent=0
    _
  %s12 = ssub.s32 1, %s10
  %s13 = scalar_select 0, %s12, %s10
  $region1: #{tpu_custom_call.1} parent=0
    #allocation2 [shape = 'u8[196608]{0}', space=vmem, size = 0x30000, scoped, tag = 'output window, operand 0, single buffered']
    #allocation3 [shape = 's32[1]{0}', space=sflag, size = 0x4, scoped, tag = 'scoped memory for tpu_custom_call.1']
    %14 = vsyncpa [#allocation3], 0
    // Predicated region
    $region2: #{tpu_custom_call.1} parent=1 // pred_check
      _
    $region3: #{tpu_custom_call.1} parent=1 // pred_check_branch
      %16 = sbr.rel (0) target = $region5
    $region4: #{tpu_custom_call.1} parent=1 // pred_region
      _
    $region5: #{tpu_custom_call.1} parent=1 // pred_fallthru
      _
    // Predicated region
    $region6: #{tpu_custom_call.1} parent=1 // pred_check
      _
    $region7: #{tpu_custom_call.1} parent=1 // pred_check_branch
      %18 = sbr.rel (0) target = $region9
    $region8: #{tpu_custom_call.1} parent=1 // pred_region
      _
    $region9: #{tpu_custom_call.1} parent=1 // pred_fallthru
      _
    // Predicated region
    $region10: #{tpu_custom_call.1} parent=1 // pred_check
      _
    $region11: #{tpu_custom_call.1} parent=1 // pred_check_branch
      %20 = sbr.rel (0) target = $region13
    $region12: #{tpu_custom_call.1} parent=1 // pred_region
      _
    $region13: #{tpu_custom_call.1} parent=1 // pred_fallthru
      _
    // Predicated region
    $region14: #{tpu_custom_call.1} parent=1 // pred_check
      _
    $region15: #{tpu_custom_call.1} parent=1 // pred_check_branch
      %22 = sbr.rel (0) target = $region17
    $region16: #{tpu_custom_call.1} parent=1 // pred_region
      _
    $region17: #{tpu_custom_call.1} parent=1 // pred_fallthru
      _
    // Predicated region
    $region18: #{tpu_custom_call.1} parent=1 // pred_check
      _
    $region19: #{tpu_custom_call.1} parent=1 // pred_check_branch
      %24 = sbr.rel (0) target = $region21
    $region20: #{tpu_custom_call.1} parent=1 // pred_region
      _
    $region21: #{tpu_custom_call.1} parent=1 // pred_fallthru
      _
    // Predicated region
    $region22: #{tpu_custom_call.1} parent=1 // pred_check
      _
    $region23: #{tpu_custom_call.1} parent=1 // pred_check_branch
      %26 = sbr.rel (0) target = $region25
    $region24: #{tpu_custom_call.1} parent=1 // pred_region
      _
    $region25: #{tpu_custom_call.1} parent=1 // pred_fallthru
      _
    // Predicated region
    $region26: #{tpu_custom_call.1} parent=1 // pred_check
      _
    $region27: #{tpu_custom_call.1} parent=1 // pred_check_branch
      %28 = sbr.rel (0) target = $region29
    $region28: #{tpu_custom_call.1} parent=1 // pred_region
      _
    $region29: #{tpu_custom_call.1} parent=1 // pred_fallthru
      _
    // Predicated region
    $region30: #{tpu_custom_call.1} parent=1 // pred_check
      _
    $region31: #{tpu_custom_call.1} parent=1 // pred_check_branch
      %30 = sbr.rel (0) target = $region33
    $region32: #{tpu_custom_call.1} parent=1 // pred_region
      _
    $region33: #{tpu_custom_call.1} parent=1 // pred_fallthru
      _
    // Predicated region
    $region34: #{tpu_custom_call.1} parent=1 // pred_check
      _
    $region35: #{tpu_custom_call.1} parent=1 // pred_check_branch
      %32 = sbr.rel (0) target = $region37
    $region36: #{tpu_custom_call.1} parent=1 // pred_region
      _
    $region37: #{tpu_custom_call.1} parent=1 // pred_fallthru
      _
    %v34 = vld [vmem:[%s0] sm:$0xff]
    %v35 = vld [vmem:[%s0 + $0x8] sm:$0xff]
    %v36 = vld [vmem:[%s0 + $0x10] sm:$0xff]
    %v37 = vld [vmem:[%s0 + $0x18] sm:$0xff]
    %v38 = vld [vmem:[%s0 + $0x20] sm:$0xff]
    %v39 = vld [vmem:[%s0 + $0x28] sm:$0xff]
    %v40 = vld [vmem:[%s0 + $0x30] sm:$0xff]
    %v41 = vld [vmem:[%s0 + $0x38] sm:$0xff]
    %v42 = vld [vmem:[%s0 + $0x40] sm:$0xff]
    %v43 = vld [vmem:[%s0 + $0x48] sm:$0xff]
    %v44 = vld [vmem:[%s0 + $0x50] sm:$0xff]
    %v45 = vld [vmem:[%s0 + $0x58] sm:$0xff]
    %v46 = vld [vmem:[%s0 + $0x60] sm:$0xff]
    %v47 = vld [vmem:[%s0 + $0x68] sm:$0xff]
    %v48 = vld [vmem:[%s0 + $0x70] sm:$0xff]
    %v49 = vld [vmem:[%s0 + $0x78] sm:$0xff]
    %v50 = vld [vmem:[%s0 + $0x80] sm:$0xff]
    %v51 = vld [vmem:[%s0 + $0x88] sm:$0xff]
    %v52 = vld [vmem:[%s0 + $0x90] sm:$0xff]
    %v53 = vld [vmem:[%s0 + $0x98] sm:$0xff]
    %v54 = vld [vmem:[%s0 + $0xa0] sm:$0xff]
    %v55 = vld [vmem:[%s0 + $0xa8] sm:$0xff]
    %v56 = vld [vmem:[%s0 + $0xb0] sm:$0xff]
    %v57 = vld [vmem:[%s0 + $0xb8] sm:$0xff]
    %v58 = vld [vmem:[%s0 + $0xc0] sm:$0xff]
    %v59 = vld [vmem:[%s0 + $0xc8] sm:$0xff]
    %v60 = vld [vmem:[%s0 + $0xd0] sm:$0xff]
    %v61 = vld [vmem:[%s0 + $0xd8] sm:$0xff]
    %v62 = vld [vmem:[%s0 + $0xe0] sm:$0xff]
    %v63 = vld [vmem:[%s0 + $0xe8] sm:$0xff]
    %v64 = vld [vmem:[%s0 + $0xf0] sm:$0xff]
    %v65 = vld [vmem:[%s0 + $0xf8] sm:$0xff]
    %v66 = vld [vmem:[%s0 + $0x100] sm:$0xff]
    %v67 = vld [vmem:[%s0 + $0x108] sm:$0xff]
    %v68 = vld [vmem:[%s0 + $0x110] sm:$0xff]
    %v69 = vld [vmem:[%s0 + $0x118] sm:$0xff]
    %v70 = vunpack.c.l.s8.bf16 %v34
    %v71 = vunpack.c.l.s8.bf16 %v35
    %v72 = vunpack.c.l.s8.bf16 %v36
    %v73 = vunpack.c.h.s8.bf16 %v34
    %v74 = vunpack.c.h.s8.bf16 %v35
    %v75 = vunpack.c.h.s8.bf16 %v36
    %v76 = vunpack.c.l.s8.bf16 %v37
    %v77 = vunpack.c.l.s8.bf16 %v38
    %v78 = vunpack.c.l.s8.bf16 %v39
    %v79 = vunpack.c.h.s8.bf16 %v37
    %v80 = vunpack.c.h.s8.bf16 %v38
    %v81 = vunpack.c.h.s8.bf16 %v39
    %v82 = vunpack.c.l.s8.bf16 %v40
    %v83 = vunpack.c.l.s8.bf16 %v41
    %v84 = vunpack.c.l.s8.bf16 %v42
    %v85 = vunpack.c.h.s8.bf16 %v40
    %v86 = vunpack.c.h.s8.bf16 %v41
    %v87 = vunpack.c.h.s8.bf16 %v42
    %v88 = vunpack.c.l.s8.bf16 %v43
    %v89 = vunpack.c.l.s8.bf16 %v44
    %v90 = vunpack.c.l.s8.bf16 %v45
    %v91 = vunpack.c.h.s8.bf16 %v43
    %v92 = vunpack.c.h.s8.bf16 %v44
    %v93 = vunpack.c.h.s8.bf16 %v45
    %v94 = vunpack.c.l.s8.bf16 %v46
    %v95 = vunpack.c.l.s8.bf16 %v47
    %v96 = vunpack.c.l.s8.bf16 %v48
    %v97 = vunpack.c.h.s8.bf16 %v46
    %v98 = vunpack.c.h.s8.bf16 %v47
    %v99 = vunpack.c.h.s8.bf16 %v48
    %v100 = vunpack.c.l.s8.bf16 %v49
    %v101 = vunpack.c.l.s8.bf16 %v50
    %v102 = vunpack.c.l.s8.bf16 %v51
    %v103 = vunpack.c.h.s8.bf16 %v49
    %v104 = vunpack.c.h.s8.bf16 %v50
    %v105 = vunpack.c.h.s8.bf16 %v51
    %v106 = vunpack.c.l.s8.bf16 %v52
    %v107 = vunpack.c.l.s8.bf16 %v53
    %v108 = vunpack.c.l.s8.bf16 %v54
    %v109 = vunpack.c.h.s8.bf16 %v52
    %v110 = vunpack.c.h.s8.bf16 %v53
    %v111 = vunpack.c.h.s8.bf16 %v54
    %v112 = vunpack.c.l.s8.bf16 %v55
    %v113 = vunpack.c.l.s8.bf16 %v56
    %v114 = vunpack.c.l.s8.bf16 %v57
    %v115 = vunpack.c.h.s8.bf16 %v55
    %v116 = vunpack.c.h.s8.bf16 %v56
    %v117 = vunpack.c.h.s8.bf16 %v57
    %v118 = vunpack.c.l.s8.bf16 %v58
    %v119 = vunpack.c.l.s8.bf16 %v59
    %v120 = vunpack.c.l.s8.bf16 %v60
    %v121 = vunpack.c.h.s8.bf16 %v58
    %v122 = vunpack.c.h.s8.bf16 %v59
    %v123 = vunpack.c.h.s8.bf16 %v60
    %v124 = vunpack.c.l.s8.bf16 %v61
    %v125 = vunpack.c.l.s8.bf16 %v62
    %v126 = vunpack.c.l.s8.bf16 %v63
    %v127 = vunpack.c.h.s8.bf16 %v61
    %v128 = vunpack.c.h.s8.bf16 %v62
    %v129 = vunpack.c.h.s8.bf16 %v63
    %v130 = vunpack.c.l.s8.bf16 %v64
    %v131 = vunpack.c.l.s8.bf16 %v65
    %v132 = vunpack.c.l.s8.bf16 %v66
    %v133 = vunpack.c.h.s8.bf16 %v64
    %v134 = vunpack.c.h.s8.bf16 %v65
    %v135 = vunpack.c.h.s8.bf16 %v66
    %v136 = vunpack.c.l.s8.bf16 %v67
    %v137 = vunpack.c.l.s8.bf16 %v68
    %v138 = vunpack.c.l.s8.bf16 %v69
    %v139 = vunpack.c.h.s8.bf16 %v67
    %v140 = vunpack.c.h.s8.bf16 %v68
    %v141 = vunpack.c.h.s8.bf16 %v69
    %v142 = vld [vmem:[%s1] sm:$0xf]
    %v143 = vld [vmem:[%s1 + $0x4] sm:$0xf]
    %v144 = vld [vmem:[%s1 + $0x8] sm:$0xf]
    %v145 = vld [vmem:[%s1 + $0xc] sm:$0xf]
    %v146 = vld [vmem:[%s1 + $0x10] sm:$0xf]
    %v147 = vld [vmem:[%s1 + $0x14] sm:$0xf]
    %v148 = vld [vmem:[%s1 + $0x18] sm:$0xf]
    %v149 = vld [vmem:[%s1 + $0x1c] sm:$0xf]
    %v150 = vld [vmem:[%s1 + $0x20] sm:$0xf]
    %v151 = vld [vmem:[%s1 + $0x24] sm:$0xf]
    %v152 = vld [vmem:[%s1 + $0x28] sm:$0xf]
    %v153 = vld [vmem:[%s1 + $0x2c] sm:$0xf]
    %v154 = vld [vmem:[%s1 + $0x30] sm:$0xf]
    %v155 = vld [vmem:[%s1 + $0x34] sm:$0xf]
    %v156 = vld [vmem:[%s1 + $0x38] sm:$0xf]
    %v157 = vld [vmem:[%s1 + $0x3c] sm:$0xf]
    %v158 = vld [vmem:[%s1 + $0x40] sm:$0xf]
    %v159 = vld [vmem:[%s1 + $0x44] sm:$0xf]
    %v160 = vld [vmem:[%s1 + $0x48] sm:$0xf]
    %v161 = vld [vmem:[%s1 + $0x4c] sm:$0xf]
    %v162 = vld [vmem:[%s1 + $0x50] sm:$0xf]
    %v163 = vld [vmem:[%s1 + $0x54] sm:$0xf]
    %v164 = vld [vmem:[%s1 + $0x58] sm:$0xf]
    %v165 = vld [vmem:[%s1 + $0x5c] sm:$0xf]
    %v166 = vld [vmem:[%s1 + $0x60] sm:$0xf]
    %v167 = vld [vmem:[%s1 + $0x64] sm:$0xf]
    %v168 = vld [vmem:[%s1 + $0x68] sm:$0xf]
    %v169 = vld [vmem:[%s1 + $0x6c] sm:$0xf]
    %v170 = vld [vmem:[%s1 + $0x70] sm:$0xf]
    %v171 = vld [vmem:[%s1 + $0x74] sm:$0xf]
    %v172 = vld [vmem:[%s1 + $0x78] sm:$0xf]
    %v173 = vld [vmem:[%s1 + $0x7c] sm:$0xf]
    %v174 = vld [vmem:[%s1 + $0x80] sm:$0xf]
    %v175 = vld [vmem:[%s1 + $0x84] sm:$0xf]
    %v176 = vld [vmem:[%s1 + $0x88] sm:$0xf]
    %v177 = vld [vmem:[%s1 + $0x8c] sm:$0xf]
    %v178 = vld [vmem:[%s1 + $0x90] sm:$0xf]
    %v179 = vld [vmem:[%s1 + $0x94] sm:$0xf]
    %v180 = vld [vmem:[%s1 + $0x98] sm:$0xf]
    %v181 = vld [vmem:[%s1 + $0x9c] sm:$0xf]
    %v182 = vld [vmem:[%s1 + $0xa0] sm:$0xf]
    %v183 = vld [vmem:[%s1 + $0xa4] sm:$0xf]
    %v184 = vld [vmem:[%s1 + $0xa8] sm:$0xf]
    %v185 = vld [vmem:[%s1 + $0xac] sm:$0xf]
    %v186 = vld [vmem:[%s1 + $0xb0] sm:$0xf]
    %v187 = vld [vmem:[%s1 + $0xb4] sm:$0xf]
    %v188 = vld [vmem:[%s1 + $0xb8] sm:$0xf]
    %v189 = vld [vmem:[%s1 + $0xbc] sm:$0xf]
    %v190 = vld [vmem:[%s2] sm:$0x1]
    %v191 = vld [vmem:[%s3] sm:$0xff]
    %v192 = vld [vmem:[%s3 + $0x8] sm:$0xff]
    %v193 = vld [vmem:[%s4] sm:$0x1]
    %v195 = vlaneseq
    %v196 = vshrl.u32 %v195, 7
    %v197 = vsub.s32 0, %v196
    %v198 = vrot.slane %v190, %v197
    %v248 = vunpack.c.l.b16 %v142
    %v249 = vunpack.c.l.b16 %v143
    %v250 = vunpack.c.l.b16 %v144
    %v251 = vunpack.c.l.b16 %v145
    %v252 = vunpack.c.l.b16 %v146
    %v253 = vunpack.c.l.b16 %v147
    %v254 = vunpack.c.l.b16 %v148
    %v255 = vunpack.c.l.b16 %v149
    %v256 = vunpack.c.l.b16 %v150
    %v257 = vunpack.c.l.b16 %v151
    %v258 = vunpack.c.l.b16 %v152
    %v259 = vunpack.c.l.b16 %v153
    %v260 = vunpack.c.l.b16 %v154
    %v261 = vunpack.c.l.b16 %v155
    %v262 = vunpack.c.l.b16 %v156
    %v263 = vunpack.c.l.b16 %v157
    %v264 = vunpack.c.l.b16 %v158
    %v265 = vunpack.c.l.b16 %v159
    %v266 = vunpack.c.l.b16 %v160
    %v267 = vunpack.c.l.b16 %v161
    %v268 = vunpack.c.l.b16 %v162
    %v269 = vunpack.c.l.b16 %v163
    %v270 = vunpack.c.l.b16 %v164
    %v271 = vunpack.c.l.b16 %v165
    %v272 = vunpack.c.l.b16 %v166
    %v273 = vunpack.c.l.b16 %v167
    %v274 = vunpack.c.l.b16 %v168
    %v275 = vunpack.c.l.b16 %v169
    %v276 = vunpack.c.l.b16 %v170
    %v277 = vunpack.c.l.b16 %v171
    %v278 = vunpack.c.l.b16 %v172
    %v279 = vunpack.c.l.b16 %v173
    %v280 = vunpack.c.l.b16 %v174
    %v281 = vunpack.c.l.b16 %v175
    %v282 = vunpack.c.l.b16 %v176
    %v283 = vunpack.c.l.b16 %v177
    %v284 = vunpack.c.l.b16 %v178
    %v285 = vunpack.c.l.b16 %v179
    %v286 = vunpack.c.l.b16 %v180
    %v287 = vunpack.c.l.b16 %v181
    %v288 = vunpack.c.l.b16 %v182
    %v289 = vunpack.c.l.b16 %v183
    %v290 = vunpack.c.l.b16 %v184
    %v291 = vunpack.c.l.b16 %v185
    %v292 = vunpack.c.l.b16 %v186
    %v293 = vunpack.c.l.b16 %v187
    %v294 = vunpack.c.l.b16 %v188
    %v295 = vunpack.c.l.b16 %v189
    %v296 = vpack.c.b16 %v249, %v248
    %v297 = vpack.c.b16 %v251, %v250
    %v298 = vpack.c.b16 %v253, %v252
    %v299 = vpack.c.b16 %v255, %v254
    %v300 = vpack.c.b16 %v257, %v256
    %v301 = vpack.c.b16 %v259, %v258
    %v302 = vpack.c.b16 %v261, %v260
    %v303 = vpack.c.b16 %v263, %v262
    %v304 = vpack.c.b16 %v265, %v264
    %v305 = vpack.c.b16 %v267, %v266
    %v306 = vpack.c.b16 %v269, %v268
    %v307 = vpack.c.b16 %v271, %v270
    %v308 = vpack.c.b16 %v273, %v272
    %v309 = vpack.c.b16 %v275, %v274
    %v310 = vpack.c.b16 %v277, %v276
    %v311 = vpack.c.b16 %v279, %v278
    %v312 = vpack.c.b16 %v281, %v280
    %v313 = vpack.c.b16 %v283, %v282
    %v314 = vpack.c.b16 %v285, %v284
    %v315 = vpack.c.b16 %v287, %v286
    %v316 = vpack.c.b16 %v289, %v288
    %v317 = vpack.c.b16 %v291, %v290
    %v318 = vpack.c.b16 %v293, %v292
    %v319 = vpack.c.b16 %v295, %v294
    %344 = vmatprep.subr.bf16.mxu0 0
    %345 = vmatpush1.bf16.msra.mxu0 %v303
    %346 = vmatprep.subr.bf16.mxu0 0
    %347 = vmatpush1.bf16.msra.mxu0 %v302
    %348 = vmatprep.subr.bf16.mxu0 0
    %349 = vmatpush1.bf16.msra.mxu0 %v301
    %350 = vmatprep.subr.bf16.mxu0 0
    %351 = vmatpush1.bf16.msra.mxu0 %v300
    %352 = vmatprep.subr.bf16.mxu0 0
    %353 = vmatpush1.bf16.msra.mxu0 %v299
    %354 = vmatprep.subr.bf16.mxu0 0
    %355 = vmatpush1.bf16.msra.mxu0 %v298
    %356 = vmatprep.subr.bf16.mxu0 0
    %357 = vmatpush1.bf16.msra.mxu0 %v297
    %358 = vmatprep.subr.bf16.mxu0 0
    %359 = vmatpush1.bf16.msra.mxu0 %v296
    %360 = vmatprep.subr.bf16.mxu0 0
    %361 = vmatpush2.bf16.msra.mxu0 %v311
    %362 = vmatprep.subr.bf16.mxu0 0
    %363 = vmatpush2.bf16.msra.mxu0 %v310
    %364 = vmatprep.subr.bf16.mxu0 0
    %365 = vmatpush2.bf16.msra.mxu0 %v309
    %366 = vmatprep.subr.bf16.mxu0 0
    %367 = vmatpush2.bf16.msra.mxu0 %v308
    %368 = vmatprep.subr.bf16.mxu0 0
    %369 = vmatpush2.bf16.msra.mxu0 %v307
    %370 = vmatprep.subr.bf16.mxu0 0
    %371 = vmatpush2.bf16.msra.mxu0 %v306
    %372 = vmatprep.subr.bf16.mxu0 0
    %373 = vmatpush2.bf16.msra.mxu0 %v305
    %374 = vmatprep.subr.bf16.mxu0 0
    %375 = vmatpush2.bf16.msra.mxu0 %v304
    %376 = vmatprep.mubr.bf16.mxu0 %v71
    %377 = vmatmul.mubr.bf16.gmra.mxu0 %v70
    %v378 = vpop.f32.mrf.mxu0
    %v379 = vadd.f32 %v198, %v378
    %v380 = vpop.f32.mrf.mxu0
    %v381 = vpop.f32.mrf.mxu0
    %v382 = vadd.f32 %v198, %v381
    %v383 = vpop.f32.mrf.mxu0
    %384 = vmatprep.mubr.bf16.mxu0 %v74
    %385 = vmatmul.mubr.bf16.gmra.mxu0 %v73
    %v386 = vpop.f32.mrf.mxu0
    %v387 = vadd.f32 %v198, %v386
    %v388 = vpop.f32.mrf.mxu0
    %v389 = vpop.f32.mrf.mxu0
    %v390 = vadd.f32 %v198, %v389
    %v391 = vpop.f32.mrf.mxu0
    %392 = vmatprep.mubr.bf16.mxu0 %v77
    %393 = vmatmul.mubr.bf16.gmra.mxu0 %v76
    %v394 = vpop.f32.mrf.mxu0
    %v395 = vadd.f32 %v198, %v394
    %v396 = vpop.f32.mrf.mxu0
    %v397 = vpop.f32.mrf.mxu0
    %v398 = vadd.f32 %v198, %v397
    %v399 = vpop.f32.mrf.mxu0
    %400 = vmatprep.mubr.bf16.mxu0 %v80
    %401 = vmatmul.mubr.bf16.gmra.mxu0 %v79
    %v402 = vpop.f32.mrf.mxu0
    %v403 = vadd.f32 %v198, %v402
    %v404 = vpop.f32.mrf.mxu0
    %v405 = vpop.f32.mrf.mxu0
    %v406 = vadd.f32 %v198, %v405
    %v407 = vpop.f32.mrf.mxu0
    %408 = vmatprep.mubr.bf16.mxu0 %v83
    %409 = vmatmul.mubr.bf16.gmra.mxu0 %v82
    %v410 = vpop.f32.mrf.mxu0
    %v411 = vadd.f32 %v198, %v410
    %v412 = vpop.f32.mrf.mxu0
    %v413 = vpop.f32.mrf.mxu0
    %v414 = vadd.f32 %v198, %v413
    %v415 = vpop.f32.mrf.mxu0
    %416 = vmatprep.mubr.bf16.mxu0 %v86
    %417 = vmatmul.mubr.bf16.gmra.mxu0 %v85
    %v418 = vpop.f32.mrf.mxu0
    %v419 = vadd.f32 %v198, %v418
    %v420 = vpop.f32.mrf.mxu0
    %v421 = vpop.f32.mrf.mxu0
    %v422 = vadd.f32 %v198, %v421
    %v423 = vpop.f32.mrf.mxu0
    %424 = vmatprep.mubr.bf16.mxu0 %v89
    %425 = vmatmul.mubr.bf16.gmra.mxu0 %v88
    %v426 = vpop.f32.mrf.mxu0
    %v427 = vadd.f32 %v198, %v426
    %v428 = vpop.f32.mrf.mxu0
    %v429 = vpop.f32.mrf.mxu0
    %v430 = vadd.f32 %v198, %v429
    %v431 = vpop.f32.mrf.mxu0
    %432 = vmatprep.mubr.bf16.mxu0 %v92
    %433 = vmatmul.mubr.bf16.gmra.mxu0 %v91
    %v434 = vpop.f32.mrf.mxu0
    %v435 = vadd.f32 %v198, %v434
    %v436 = vpop.f32.mrf.mxu0
    %v437 = vpop.f32.mrf.mxu0
    %v438 = vadd.f32 %v198, %v437
    %v439 = vpop.f32.mrf.mxu0
    %440 = vmatprep.mubr.bf16.mxu0 %v95
    %441 = vmatmul.mubr.bf16.gmra.mxu0 %v94
    %v442 = vpop.f32.mrf.mxu0
    %v443 = vadd.f32 %v198, %v442
    %v444 = vpop.f32.mrf.mxu0
    %v445 = vpop.f32.mrf.mxu0
    %v446 = vadd.f32 %v198, %v445
    %v447 = vpop.f32.mrf.mxu0
    %448 = vmatprep.mubr.bf16.mxu0 %v98
    %449 = vmatmul.mubr.bf16.gmra.mxu0 %v97
    %v450 = vpop.f32.mrf.mxu0
    %v451 = vadd.f32 %v198, %v450
    %v452 = vpop.f32.mrf.mxu0
    %v453 = vpop.f32.mrf.mxu0
    %v454 = vadd.f32 %v198, %v453
    %v455 = vpop.f32.mrf.mxu0
    %456 = vmatprep.mubr.bf16.mxu0 %v101
    %457 = vmatmul.mubr.bf16.gmra.mxu0 %v100
    %v458 = vpop.f32.mrf.mxu0
    %v459 = vadd.f32 %v198, %v458
    %v460 = vpop.f32.mrf.mxu0
    %v461 = vpop.f32.mrf.mxu0
    %v462 = vadd.f32 %v198, %v461
    %v463 = vpop.f32.mrf.mxu0
    %464 = vmatprep.mubr.bf16.mxu0 %v104
    %465 = vmatmul.mubr.bf16.gmra.mxu0 %v103
    %v466 = vpop.f32.mrf.mxu0
    %v467 = vadd.f32 %v198, %v466
    %v468 = vpop.f32.mrf.mxu0
    %v469 = vpop.f32.mrf.mxu0
    %v470 = vadd.f32 %v198, %v469
    %v471 = vpop.f32.mrf.mxu0
    %472 = vmatprep.mubr.bf16.mxu0 %v107
    %473 = vmatmul.mubr.bf16.gmra.mxu0 %v106
    %v474 = vpop.f32.mrf.mxu0
    %v475 = vadd.f32 %v198, %v474
    %v476 = vpop.f32.mrf.mxu0
    %v477 = vpop.f32.mrf.mxu0
    %v478 = vadd.f32 %v198, %v477
    %v479 = vpop.f32.mrf.mxu0
    %480 = vmatprep.mubr.bf16.mxu0 %v110
    %481 = vmatmul.mubr.bf16.gmra.mxu0 %v109
    %v482 = vpop.f32.mrf.mxu0
    %v483 = vadd.f32 %v198, %v482
    %v484 = vpop.f32.mrf.mxu0
    %v485 = vpop.f32.mrf.mxu0
    %v486 = vadd.f32 %v198, %v485
    %v487 = vpop.f32.mrf.mxu0
    %488 = vmatprep.mubr.bf16.mxu0 %v113
    %489 = vmatmul.mubr.bf16.gmra.mxu0 %v112
    %v490 = vpop.f32.mrf.mxu0
    %v491 = vadd.f32 %v198, %v490
    %v492 = vpop.f32.mrf.mxu0
    %v493 = vpop.f32.mrf.mxu0
    %v494 = vadd.f32 %v198, %v493
    %v495 = vpop.f32.mrf.mxu0
    %496 = vmatprep.mubr.bf16.mxu0 %v116
    %497 = vmatmul.mubr.bf16.gmra.mxu0 %v115
    %v498 = vpop.f32.mrf.mxu0
    %v499 = vadd.f32 %v198, %v498
    %v500 = vpop.f32.mrf.mxu0
    %v501 = vpop.f32.mrf.mxu0
    %v502 = vadd.f32 %v198, %v501
    %v503 = vpop.f32.mrf.mxu0
    %504 = vmatprep.mubr.bf16.mxu0 %v119
    %505 = vmatmul.mubr.bf16.gmra.mxu0 %v118
    %v506 = vpop.f32.mrf.mxu0
    %v507 = vadd.f32 %v198, %v506
    %v508 = vpop.f32.mrf.mxu0
    %v509 = vpop.f32.mrf.mxu0
    %v510 = vadd.f32 %v198, %v509
    %v511 = vpop.f32.mrf.mxu0
    %512 = vmatprep.mubr.bf16.mxu0 %v122
    %513 = vmatmul.mubr.bf16.gmra.mxu0 %v121
    %v514 = vpop.f32.mrf.mxu0
    %v515 = vadd.f32 %v198, %v514
    %v516 = vpop.f32.mrf.mxu0
    %v517 = vpop.f32.mrf.mxu0
    %v518 = vadd.f32 %v198, %v517
    %v519 = vpop.f32.mrf.mxu0
    %520 = vmatprep.mubr.bf16.mxu0 %v125
    %521 = vmatmul.mubr.bf16.gmra.mxu0 %v124
    %v522 = vpop.f32.mrf.mxu0
    %v523 = vadd.f32 %v198, %v522
    %v524 = vpop.f32.mrf.mxu0
    %v525 = vpop.f32.mrf.mxu0
    %v526 = vadd.f32 %v198, %v525
    %v527 = vpop.f32.mrf.mxu0
    %528 = vmatprep.mubr.bf16.mxu0 %v128
    %529 = vmatmul.mubr.bf16.gmra.mxu0 %v127
    %v530 = vpop.f32.mrf.mxu0
    %v531 = vadd.f32 %v198, %v530
    %v532 = vpop.f32.mrf.mxu0
    %v533 = vpop.f32.mrf.mxu0
    %v534 = vadd.f32 %v198, %v533
    %v535 = vpop.f32.mrf.mxu0
    %536 = vmatprep.mubr.bf16.mxu0 %v131
    %537 = vmatmul.mubr.bf16.gmra.mxu0 %v130
    %v538 = vpop.f32.mrf.mxu0
    %v539 = vadd.f32 %v198, %v538
    %v540 = vpop.f32.mrf.mxu0
    %v541 = vpop.f32.mrf.mxu0
    %v542 = vadd.f32 %v198, %v541
    %v543 = vpop.f32.mrf.mxu0
    %544 = vmatprep.mubr.bf16.mxu0 %v134
    %545 = vmatmul.mubr.bf16.gmra.mxu0 %v133
    %v546 = vpop.f32.mrf.mxu0
    %v547 = vadd.f32 %v198, %v546
    %v548 = vpop.f32.mrf.mxu0
    %v549 = vpop.f32.mrf.mxu0
    %v550 = vadd.f32 %v198, %v549
    %v551 = vpop.f32.mrf.mxu0
    %552 = vmatprep.mubr.bf16.mxu0 %v137
    %553 = vmatmul.mubr.bf16.gmra.mxu0 %v136
    %v554 = vpop.f32.mrf.mxu0
    %v555 = vadd.f32 %v198, %v554
    %v556 = vpop.f32.mrf.mxu0
    %v557 = vpop.f32.mrf.mxu0
    %v558 = vadd.f32 %v198, %v557
    %v559 = vpop.f32.mrf.mxu0
    %560 = vmatprep.mubr.bf16.mxu0 %v140
    %561 = vmatmul.mubr.bf16.gmra.mxu0 %v139
    %v562 = vpop.f32.mrf.mxu0
    %v563 = vadd.f32 %v198, %v562
    %v564 = vpop.f32.mrf.mxu0
    %v565 = vpop.f32.mrf.mxu0
    %v566 = vadd.f32 %v198, %v565
    %v567 = vpop.f32.mrf.mxu0
    %568 = vdwg.mxu0
    %569 = vmatprep.subr.bf16.mxu0 0
    %570 = vmatpush1.bf16.msra.mxu0 %v319
    %571 = vmatprep.subr.bf16.mxu0 0
    %572 = vmatpush1.bf16.msra.mxu0 %v318
    %573 = vmatprep.subr.bf16.mxu0 0
    %574 = vmatpush1.bf16.msra.mxu0 %v317
    %575 = vmatprep.subr.bf16.mxu0 0
    %576 = vmatpush1.bf16.msra.mxu0 %v316
    %577 = vmatprep.subr.bf16.mxu0 0
    %578 = vmatpush1.bf16.msra.mxu0 %v315
    %579 = vmatprep.subr.bf16.mxu0 0
    %580 = vmatpush1.bf16.msra.mxu0 %v314
    %581 = vmatprep.subr.bf16.mxu0 0
    %582 = vmatpush1.bf16.msra.mxu0 %v313
    %583 = vmatprep.subr.bf16.mxu0 0
    %584 = vmatpush1.bf16.msra.mxu0 %v312
    %585 = vmatprep.subr.bf16.mxu0 0
    %586 = vmatpush2.bf16.msra.mxu0 0
    %587 = vmatprep.subr.bf16.mxu0 0
    %588 = vmatpush2.bf16.msra.mxu0 0
    %589 = vmatprep.subr.bf16.mxu0 0
    %590 = vmatpush2.bf16.msra.mxu0 0
    %591 = vmatprep.subr.bf16.mxu0 0
    %592 = vmatpush2.bf16.msra.mxu0 0
    %593 = vmatprep.subr.bf16.mxu0 0
    %594 = vmatpush2.bf16.msra.mxu0 0
    %595 = vmatprep.subr.bf16.mxu0 0
    %596 = vmatpush2.bf16.msra.mxu0 0
    %597 = vmatprep.subr.bf16.mxu0 0
    %598 = vmatpush2.bf16.msra.mxu0 0
    %599 = vmatprep.subr.bf16.mxu0 0
    %600 = vmatpush2.bf16.msra.mxu0 0
    %601 = vmatprep.mubr.bf16.mxu0 0
    %602 = vmatmul.mubr.bf16.gmra.mxu0 %v72
    %v603 = vpop.f32.mrf.mxu0
    %v604 = vadd.f32 %v379, %v603
    %v605 = vpop.f32.mrf.mxu0
    %v606 = vpop.f32.mrf.mxu0
    %v607 = vadd.f32 %v382, %v606
    %v608 = vpop.f32.mrf.mxu0
    %609 = vmatprep.mubr.bf16.mxu0 0
    %610 = vmatmul.mubr.bf16.gmra.mxu0 %v75
    %v611 = vpop.f32.mrf.mxu0
    %v612 = vadd.f32 %v387, %v611
    %v613 = vpop.f32.mrf.mxu0
    %v614 = vpop.f32.mrf.mxu0
    %v615 = vadd.f32 %v390, %v614
    %v616 = vpop.f32.mrf.mxu0
    %617 = vmatprep.mubr.bf16.mxu0 0
    %618 = vmatmul.mubr.bf16.gmra.mxu0 %v78
    %v619 = vpop.f32.mrf.mxu0
    %v620 = vadd.f32 %v395, %v619
    %v621 = vpop.f32.mrf.mxu0
    %v622 = vpop.f32.mrf.mxu0
    %v623 = vadd.f32 %v398, %v622
    %v624 = vpop.f32.mrf.mxu0
    %625 = vmatprep.mubr.bf16.mxu0 0
    %626 = vmatmul.mubr.bf16.gmra.mxu0 %v81
    %v627 = vpop.f32.mrf.mxu0
    %v628 = vadd.f32 %v403, %v627
    %v629 = vpop.f32.mrf.mxu0
    %v630 = vpop.f32.mrf.mxu0
    %v631 = vadd.f32 %v406, %v630
    %v632 = vpop.f32.mrf.mxu0
    %633 = vmatprep.mubr.bf16.mxu0 0
    %634 = vmatmul.mubr.bf16.gmra.mxu0 %v84
    %v635 = vpop.f32.mrf.mxu0
    %v636 = vadd.f32 %v411, %v635
    %v637 = vpop.f32.mrf.mxu0
    %v638 = vpop.f32.mrf.mxu0
    %v639 = vadd.f32 %v414, %v638
    %v640 = vpop.f32.mrf.mxu0
    %641 = vmatprep.mubr.bf16.mxu0 0
    %642 = vmatmul.mubr.bf16.gmra.mxu0 %v87
    %v643 = vpop.f32.mrf.mxu0
    %v644 = vadd.f32 %v419, %v643
    %v645 = vpop.f32.mrf.mxu0
    %v646 = vpop.f32.mrf.mxu0
    %v647 = vadd.f32 %v422, %v646
    %v648 = vpop.f32.mrf.mxu0
    %649 = vmatprep.mubr.bf16.mxu0 0
    %650 = vmatmul.mubr.bf16.gmra.mxu0 %v90
    %v651 = vpop.f32.mrf.mxu0
    %v652 = vadd.f32 %v427, %v651
    %v653 = vpop.f32.mrf.mxu0
    %v654 = vpop.f32.mrf.mxu0
    %v655 = vadd.f32 %v430, %v654
    %v656 = vpop.f32.mrf.mxu0
    %657 = vmatprep.mubr.bf16.mxu0 0
    %658 = vmatmul.mubr.bf16.gmra.mxu0 %v93
    %v659 = vpop.f32.mrf.mxu0
    %v660 = vadd.f32 %v435, %v659
    %v661 = vpop.f32.mrf.mxu0
    %v662 = vpop.f32.mrf.mxu0
    %v663 = vadd.f32 %v438, %v662
    %v664 = vpop.f32.mrf.mxu0
    %665 = vmatprep.mubr.bf16.mxu0 0
    %666 = vmatmul.mubr.bf16.gmra.mxu0 %v96
    %v667 = vpop.f32.mrf.mxu0
    %v668 = vadd.f32 %v443, %v667
    %v669 = vpop.f32.mrf.mxu0
    %v670 = vpop.f32.mrf.mxu0
    %v671 = vadd.f32 %v446, %v670
    %v672 = vpop.f32.mrf.mxu0
    %673 = vmatprep.mubr.bf16.mxu0 0
    %674 = vmatmul.mubr.bf16.gmra.mxu0 %v99
    %v675 = vpop.f32.mrf.mxu0
    %v676 = vadd.f32 %v451, %v675
    %v677 = vpop.f32.mrf.mxu0
    %v678 = vpop.f32.mrf.mxu0
    %v679 = vadd.f32 %v454, %v678
    %v680 = vpop.f32.mrf.mxu0
    %681 = vmatprep.mubr.bf16.mxu0 0
    %682 = vmatmul.mubr.bf16.gmra.mxu0 %v102
    %v683 = vpop.f32.mrf.mxu0
    %v684 = vadd.f32 %v459, %v683
    %v685 = vpop.f32.mrf.mxu0
    %v686 = vpop.f32.mrf.mxu0
    %v687 = vadd.f32 %v462, %v686
    %v688 = vpop.f32.mrf.mxu0
    %689 = vmatprep.mubr.bf16.mxu0 0
    %690 = vmatmul.mubr.bf16.gmra.mxu0 %v105
    %v691 = vpop.f32.mrf.mxu0
    %v692 = vadd.f32 %v467, %v691
    %v693 = vpop.f32.mrf.mxu0
    %v694 = vpop.f32.mrf.mxu0
    %v695 = vadd.f32 %v470, %v694
    %v696 = vpop.f32.mrf.mxu0
    %697 = vmatprep.mubr.bf16.mxu0 0
    %698 = vmatmul.mubr.bf16.gmra.mxu0 %v108
    %v699 = vpop.f32.mrf.mxu0
    %v700 = vadd.f32 %v475, %v699
    %v701 = vpop.f32.mrf.mxu0
    %v702 = vpop.f32.mrf.mxu0
    %v703 = vadd.f32 %v478, %v702
    %v704 = vpop.f32.mrf.mxu0
    %705 = vmatprep.mubr.bf16.mxu0 0
    %706 = vmatmul.mubr.bf16.gmra.mxu0 %v111
    %v707 = vpop.f32.mrf.mxu0
    %v708 = vadd.f32 %v483, %v707
    %v709 = vpop.f32.mrf.mxu0
    %v710 = vpop.f32.mrf.mxu0
    %v711 = vadd.f32 %v486, %v710
    %v712 = vpop.f32.mrf.mxu0
    %713 = vmatprep.mubr.bf16.mxu0 0
    %714 = vmatmul.mubr.bf16.gmra.mxu0 %v114
    %v715 = vpop.f32.mrf.mxu0
    %v716 = vadd.f32 %v491, %v715
    %v717 = vpop.f32.mrf.mxu0
    %v718 = vpop.f32.mrf.mxu0
    %v719 = vadd.f32 %v494, %v718
    %v720 = vpop.f32.mrf.mxu0
    %721 = vmatprep.mubr.bf16.mxu0 0
    %722 = vmatmul.mubr.bf16.gmra.mxu0 %v117
    %v723 = vpop.f32.mrf.mxu0
    %v724 = vadd.f32 %v499, %v723
    %v725 = vpop.f32.mrf.mxu0
    %v726 = vpop.f32.mrf.mxu0
    %v727 = vadd.f32 %v502, %v726
    %v728 = vpop.f32.mrf.mxu0
    %729 = vmatprep.mubr.bf16.mxu0 0
    %730 = vmatmul.mubr.bf16.gmra.mxu0 %v120
    %v731 = vpop.f32.mrf.mxu0
    %v732 = vadd.f32 %v507, %v731
    %v733 = vpop.f32.mrf.mxu0
    %v734 = vpop.f32.mrf.mxu0
    %v735 = vadd.f32 %v510, %v734
    %v736 = vpop.f32.mrf.mxu0
    %737 = vmatprep.mubr.bf16.mxu0 0
    %738 = vmatmul.mubr.bf16.gmra.mxu0 %v123
    %v739 = vpop.f32.mrf.mxu0
    %v740 = vadd.f32 %v515, %v739
    %v741 = vpop.f32.mrf.mxu0
    %v742 = vpop.f32.mrf.mxu0
    %v743 = vadd.f32 %v518, %v742
    %v744 = vpop.f32.mrf.mxu0
    %745 = vmatprep.mubr.bf16.mxu0 0
    %746 = vmatmul.mubr.bf16.gmra.mxu0 %v126
    %v747 = vpop.f32.mrf.mxu0
    %v748 = vadd.f32 %v523, %v747
    %v749 = vpop.f32.mrf.mxu0
    %v750 = vpop.f32.mrf.mxu0
    %v751 = vadd.f32 %v526, %v750
    %v752 = vpop.f32.mrf.mxu0
    %753 = vmatprep.mubr.bf16.mxu0 0
    %754 = vmatmul.mubr.bf16.gmra.mxu0 %v129
    %v755 = vpop.f32.mrf.mxu0
    %v756 = vadd.f32 %v531, %v755
    %v757 = vpop.f32.mrf.mxu0
    %v758 = vpop.f32.mrf.mxu0
    %v759 = vadd.f32 %v534, %v758
    %v760 = vpop.f32.mrf.mxu0
    %761 = vmatprep.mubr.bf16.mxu0 0
    %762 = vmatmul.mubr.bf16.gmra.mxu0 %v132
    %v763 = vpop.f32.mrf.mxu0
    %v764 = vadd.f32 %v539, %v763
    %v765 = vpop.f32.mrf.mxu0
    %v766 = vpop.f32.mrf.mxu0
    %v767 = vadd.f32 %v542, %v766
    %v768 = vpop.f32.mrf.mxu0
    %769 = vmatprep.mubr.bf16.mxu0 0
    %770 = vmatmul.mubr.bf16.gmra.mxu0 %v135
    %v771 = vpop.f32.mrf.mxu0
    %v772 = vadd.f32 %v547, %v771
    %v773 = vpop.f32.mrf.mxu0
    %v774 = vpop.f32.mrf.mxu0
    %v775 = vadd.f32 %v550, %v774
    %v776 = vpop.f32.mrf.mxu0
    %777 = vmatprep.mubr.bf16.mxu0 0
    %778 = vmatmul.mubr.bf16.gmra.mxu0 %v138
    %v779 = vpop.f32.mrf.mxu0
    %v780 = vadd.f32 %v555, %v779
    %v781 = vpop.f32.mrf.mxu0
    %v782 = vpop.f32.mrf.mxu0
    %v783 = vadd.f32 %v558, %v782
    %v784 = vpop.f32.mrf.mxu0
    %785 = vmatprep.mubr.bf16.mxu0 0
    %786 = vmatmul.mubr.bf16.gmra.mxu0 %v141
    %v787 = vpop.f32.mrf.mxu0
    %v788 = vadd.f32 %v563, %v787
    %v789 = vpop.f32.mrf.mxu0
    %v790 = vpop.f32.mrf.mxu0
    %v791 = vadd.f32 %v566, %v790
    %v792 = vpop.f32.mrf.mxu0
    %793 = vdwg.mxu0
    %v794 = vmax.f32 %v604, 0.0
    %v795 = vmax.f32 %v607, 0.0
    %v796 = vmax.f32 %v612, 0.0
    %v797 = vmax.f32 %v615, 0.0
    %v798 = vmax.f32 %v620, 0.0
    %v799 = vmax.f32 %v623, 0.0
    %v800 = vmax.f32 %v628, 0.0
    %v801 = vmax.f32 %v631, 0.0
    %v802 = vmax.f32 %v636, 0.0
    %v803 = vmax.f32 %v639, 0.0
    %v804 = vmax.f32 %v644, 0.0
    %v805 = vmax.f32 %v647, 0.0
    %v806 = vmax.f32 %v652, 0.0
    %v807 = vmax.f32 %v655, 0.0
    %v808 = vmax.f32 %v660, 0.0
    %v809 = vmax.f32 %v663, 0.0
    %v810 = vmax.f32 %v668, 0.0
    %v811 = vmax.f32 %v671, 0.0
    %v812 = vmax.f32 %v676, 0.0
    %v813 = vmax.f32 %v679, 0.0
    %v814 = vmax.f32 %v684, 0.0
    %v815 = vmax.f32 %v687, 0.0
    %v816 = vmax.f32 %v692, 0.0
    %v817 = vmax.f32 %v695, 0.0
    %v818 = vmax.f32 %v700, 0.0
    %v819 = vmax.f32 %v703, 0.0
    %v820 = vmax.f32 %v708, 0.0
    %v821 = vmax.f32 %v711, 0.0
    %v822 = vmax.f32 %v716, 0.0
    %v823 = vmax.f32 %v719, 0.0
    %v824 = vmax.f32 %v724, 0.0
    %v825 = vmax.f32 %v727, 0.0
    %v826 = vmax.f32 %v732, 0.0
    %v827 = vmax.f32 %v735, 0.0
    %v828 = vmax.f32 %v740, 0.0
    %v829 = vmax.f32 %v743, 0.0
    %v830 = vmax.f32 %v748, 0.0
    %v831 = vmax.f32 %v751, 0.0
    %v832 = vmax.f32 %v756, 0.0
    %v833 = vmax.f32 %v759, 0.0
    %v834 = vmax.f32 %v764, 0.0
    %v835 = vmax.f32 %v767, 0.0
    %v836 = vmax.f32 %v772, 0.0
    %v837 = vmax.f32 %v775, 0.0
    %v838 = vmax.f32 %v780, 0.0
    %v839 = vmax.f32 %v783, 0.0
    %v840 = vmax.f32 %v788, 0.0
    %v841 = vmax.f32 %v791, 0.0
    %v843 = vlaneseq
    %v844 = vshrl.u32 %v843, 7
    %v845 = vsub.s32 0, %v844
    %v846 = vrot.slane %v193, %v845
    %vm848 = vcmask 130048
    %v850 = vsel %vm848, %v794, 0
    %v853 = vsel %vm848, %v795, 0
    %v856 = vsel %vm848, %v796, 0
    %v859 = vsel %vm848, %v797, 0
    %v862 = vsel %vm848, %v798, 0
    %v865 = vsel %vm848, %v799, 0
    %v868 = vsel %vm848, %v800, 0
    %v871 = vsel %vm848, %v801, 0
    %v874 = vsel %vm848, %v802, 0
    %v877 = vsel %vm848, %v803, 0
    %v880 = vsel %vm848, %v804, 0
    %v883 = vsel %vm848, %v805, 0
    %v886 = vsel %vm848, %v806, 0
    %v889 = vsel %vm848, %v807, 0
    %v892 = vsel %vm848, %v808, 0
    %v895 = vsel %vm848, %v809, 0
    %v898 = vsel %vm848, %v810, 0
    %v901 = vsel %vm848, %v811, 0
    %v904 = vsel %vm848, %v812, 0
    %v907 = vsel %vm848, %v813, 0
    %v910 = vsel %vm848, %v814, 0
    %v913 = vsel %vm848, %v815, 0
    %v916 = vsel %vm848, %v816, 0
    %v919 = vsel %vm848, %v817, 0
    %v922 = vsel %vm848, %v818, 0
    %v925 = vsel %vm848, %v819, 0
    %v928 = vsel %vm848, %v820, 0
    %v931 = vsel %vm848, %v821, 0
    %v934 = vsel %vm848, %v822, 0
    %v937 = vsel %vm848, %v823, 0
    %v940 = vsel %vm848, %v824, 0
    %v943 = vsel %vm848, %v825, 0
    %v946 = vsel %vm848, %v826, 0
    %v949 = vsel %vm848, %v827, 0
    %v952 = vsel %vm848, %v828, 0
    %v955 = vsel %vm848, %v829, 0
    %v958 = vsel %vm848, %v830, 0
    %v961 = vsel %vm848, %v831, 0
    %v964 = vsel %vm848, %v832, 0
    %v967 = vsel %vm848, %v833, 0
    %v970 = vsel %vm848, %v834, 0
    %v973 = vsel %vm848, %v835, 0
    %v976 = vsel %vm848, %v836, 0
    %v979 = vsel %vm848, %v837, 0
    %v982 = vsel %vm848, %v838, 0
    %v985 = vsel %vm848, %v839, 0
    %v988 = vsel %vm848, %v840, 0
    %v991 = vsel %vm848, %v841, 0
    %993 = vmatprep.subr.mxu0 0.0
    %994 = vmatpush1.msra.mxu0 0.0
    %995 = vmatprep.subr.mxu0 0.0
    %996 = vmatpush1.msra.mxu0 0.0
    %997 = vmatprep.subr.mxu0 0.0
    %998 = vmatpush1.msra.mxu0 0.0
    %999 = vmatprep.subr.mxu0 0.0
    %1000 = vmatpush1.msra.mxu0 0.0
    %1001 = vmatprep.subr.mxu0 0.0
    %1002 = vmatpush1.msra.mxu0 0.0
    %1003 = vmatprep.subr.mxu0 0.0
    %1004 = vmatpush1.msra.mxu0 0.0
    %1005 = vmatprep.subr.mxu0 0.0
    %1006 = vmatpush1.msra.mxu0 0.0
    %1007 = vmatprep.subr.mxu0 0.0
    %1008 = vmatpush1.msra.mxu0 0.0
    %1009 = vmatprep.subr.mxu0 0.0
    %1010 = vmatpush1.msra.mxu0 0.0
    %1011 = vmatprep.subr.mxu0 0.0
    %1012 = vmatpush1.msra.mxu0 0.0
    %1013 = vmatprep.subr.mxu0 0.0
    %1014 = vmatpush1.msra.mxu0 0.0
    %1015 = vmatprep.subr.mxu0 0.0
    %1016 = vmatpush1.msra.mxu0 0.0
    %1017 = vmatprep.subr.mxu0 0.0
    %1018 = vmatpush1.msra.mxu0 0.0
    %1019 = vmatprep.subr.mxu0 0.0
    %1020 = vmatpush1.msra.mxu0 0.0
    %1021 = vmatprep.subr.mxu0 0.0
    %1022 = vmatpush1.msra.mxu0 %v192
    %1023 = vmatprep.subr.mxu0 0.0
    %1024 = vmatpush1.msra.mxu0 %v191
    %1025 = vmatprep.subr.mxu0 0.0
    %1026 = vmatpush2.msra.mxu0 0.0
    %1027 = vmatprep.subr.mxu0 0.0
    %1028 = vmatpush2.msra.mxu0 0.0
    %1029 = vmatprep.subr.mxu0 0.0
    %1030 = vmatpush2.msra.mxu0 0.0
    %1031 = vmatprep.subr.mxu0 0.0
    %1032 = vmatpush2.msra.mxu0 0.0
    %1033 = vmatprep.subr.mxu0 0.0
    %1034 = vmatpush2.msra.mxu0 0.0
    %1035 = vmatprep.subr.mxu0 0.0
    %1036 = vmatpush2.msra.mxu0 0.0
    %1037 = vmatprep.subr.mxu0 0.0
    %1038 = vmatpush2.msra.mxu0 0.0
    %1039 = vmatprep.subr.mxu0 0.0
    %1040 = vmatpush2.msra.mxu0 0.0
    %1041 = vmatprep.subr.mxu0 0.0
    %1042 = vmatpush2.msra.mxu0 0.0
    %1043 = vmatprep.subr.mxu0 0.0
    %1044 = vmatpush2.msra.mxu0 0.0
    %1045 = vmatprep.subr.mxu0 0.0
    %1046 = vmatpush2.msra.mxu0 0.0
    %1047 = vmatprep.subr.mxu0 0.0
    %1048 = vmatpush2.msra.mxu0 0.0
    %1049 = vmatprep.subr.mxu0 0.0
    %1050 = vmatpush2.msra.mxu0 0.0
    %1051 = vmatprep.subr.mxu0 0.0
    %1052 = vmatpush2.msra.mxu0 0.0
    %1053 = vmatprep.subr.mxu0 0.0
    %1054 = vmatpush2.msra.mxu0 0.0
    %1055 = vmatprep.subr.mxu0 0.0
    %1056 = vmatpush2.msra.mxu0 0.0
    %1057 = vmatprep.mubr.f32.mxu0 0.0
    %1058 = vmatmul.mubr.f32.gmra.mxu0 %v850
    %v1059 = vpop.f32.mrf.mxu0
    %v1060 = vadd.f32 %v846, %v1059
    %v1061 = vpop.f32.mrf.mxu0
    %1062 = vmatprep.mubr.f32.mxu0 0.0
    %1063 = vmatmul.mubr.f32.gmra.mxu0 %v853
    %v1064 = vpop.f32.mrf.mxu0
    %v1065 = vadd.f32 %v846, %v1064
    %v1066 = vpop.f32.mrf.mxu0
    %1067 = vmatprep.mubr.f32.mxu0 0.0
    %1068 = vmatmul.mubr.f32.gmra.mxu0 %v856
    %v1069 = vpop.f32.mrf.mxu0
    %v1070 = vadd.f32 %v846, %v1069
    %v1071 = vpop.f32.mrf.mxu0
    %1072 = vmatprep.mubr.f32.mxu0 0.0
    %1073 = vmatmul.mubr.f32.gmra.mxu0 %v859
    %v1074 = vpop.f32.mrf.mxu0
    %v1075 = vadd.f32 %v846, %v1074
    %v1076 = vpop.f32.mrf.mxu0
    %1077 = vmatprep.mubr.f32.mxu0 0.0
    %1078 = vmatmul.mubr.f32.gmra.mxu0 %v862
    %v1079 = vpop.f32.mrf.mxu0
    %v1080 = vadd.f32 %v846, %v1079
    %v1081 = vpop.f32.mrf.mxu0
    %1082 = vmatprep.mubr.f32.mxu0 0.0
    %1083 = vmatmul.mubr.f32.gmra.mxu0 %v865
    %v1084 = vpop.f32.mrf.mxu0
    %v1085 = vadd.f32 %v846, %v1084
    %v1086 = vpop.f32.mrf.mxu0
    %1087 = vmatprep.mubr.f32.mxu0 0.0
    %1088 = vmatmul.mubr.f32.gmra.mxu0 %v868
    %v1089 = vpop.f32.mrf.mxu0
    %v1090 = vadd.f32 %v846, %v1089
    %v1091 = vpop.f32.mrf.mxu0
    %1092 = vmatprep.mubr.f32.mxu0 0.0
    %1093 = vmatmul.mubr.f32.gmra.mxu0 %v871
    %v1094 = vpop.f32.mrf.mxu0
    %v1095 = vadd.f32 %v846, %v1094
    %v1096 = vpop.f32.mrf.mxu0
    %1097 = vmatprep.mubr.f32.mxu0 0.0
    %1098 = vmatmul.mubr.f32.gmra.mxu0 %v874
    %v1099 = vpop.f32.mrf.mxu0
    %v1100 = vadd.f32 %v846, %v1099
    %v1101 = vpop.f32.mrf.mxu0
    %1102 = vmatprep.mubr.f32.mxu0 0.0
    %1103 = vmatmul.mubr.f32.gmra.mxu0 %v877
    %v1104 = vpop.f32.mrf.mxu0
    %v1105 = vadd.f32 %v846, %v1104
    %v1106 = vpop.f32.mrf.mxu0
    %1107 = vmatprep.mubr.f32.mxu0 0.0
    %1108 = vmatmul.mubr.f32.gmra.mxu0 %v880
    %v1109 = vpop.f32.mrf.mxu0
    %v1110 = vadd.f32 %v846, %v1109
    %v1111 = vpop.f32.mrf.mxu0
    %1112 = vmatprep.mubr.f32.mxu0 0.0
    %1113 = vmatmul.mubr.f32.gmra.mxu0 %v883
    %v1114 = vpop.f32.mrf.mxu0
    %v1115 = vadd.f32 %v846, %v1114
    %v1116 = vpop.f32.mrf.mxu0
    %1117 = vmatprep.mubr.f32.mxu0 0.0
    %1118 = vmatmul.mubr.f32.gmra.mxu0 %v886
    %v1119 = vpop.f32.mrf.mxu0
    %v1120 = vadd.f32 %v846, %v1119
    %v1121 = vpop.f32.mrf.mxu0
    %1122 = vmatprep.mubr.f32.mxu0 0.0
    %1123 = vmatmul.mubr.f32.gmra.mxu0 %v889
    %v1124 = vpop.f32.mrf.mxu0
    %v1125 = vadd.f32 %v846, %v1124
    %v1126 = vpop.f32.mrf.mxu0
    %1127 = vmatprep.mubr.f32.mxu0 0.0
    %1128 = vmatmul.mubr.f32.gmra.mxu0 %v892
    %v1129 = vpop.f32.mrf.mxu0
    %v1130 = vadd.f32 %v846, %v1129
    %v1131 = vpop.f32.mrf.mxu0
    %1132 = vmatprep.mubr.f32.mxu0 0.0
    %1133 = vmatmul.mubr.f32.gmra.mxu0 %v895
    %v1134 = vpop.f32.mrf.mxu0
    %v1135 = vadd.f32 %v846, %v1134
    %v1136 = vpop.f32.mrf.mxu0
    %1137 = vmatprep.mubr.f32.mxu0 0.0
    %1138 = vmatmul.mubr.f32.gmra.mxu0 %v898
    %v1139 = vpop.f32.mrf.mxu0
    %v1140 = vadd.f32 %v846, %v1139
    %v1141 = vpop.f32.mrf.mxu0
    %1142 = vmatprep.mubr.f32.mxu0 0.0
    %1143 = vmatmul.mubr.f32.gmra.mxu0 %v901
    %v1144 = vpop.f32.mrf.mxu0
    %v1145 = vadd.f32 %v846, %v1144
    %v1146 = vpop.f32.mrf.mxu0
    %1147 = vmatprep.mubr.f32.mxu0 0.0
    %1148 = vmatmul.mubr.f32.gmra.mxu0 %v904
    %v1149 = vpop.f32.mrf.mxu0
    %v1150 = vadd.f32 %v846, %v1149
    %v1151 = vpop.f32.mrf.mxu0
    %1152 = vmatprep.mubr.f32.mxu0 0.0
    %1153 = vmatmul.mubr.f32.gmra.mxu0 %v907
    %v1154 = vpop.f32.mrf.mxu0
    %v1155 = vadd.f32 %v846, %v1154
    %v1156 = vpop.f32.mrf.mxu0
    %1157 = vmatprep.mubr.f32.mxu0 0.0
    %1158 = vmatmul.mubr.f32.gmra.mxu0 %v910
    %v1159 = vpop.f32.mrf.mxu0
    %v1160 = vadd.f32 %v846, %v1159
    %v1161 = vpop.f32.mrf.mxu0
    %1162 = vmatprep.mubr.f32.mxu0 0.0
    %1163 = vmatmul.mubr.f32.gmra.mxu0 %v913
    %v1164 = vpop.f32.mrf.mxu0
    %v1165 = vadd.f32 %v846, %v1164
    %v1166 = vpop.f32.mrf.mxu0
    %1167 = vmatprep.mubr.f32.mxu0 0.0
    %1168 = vmatmul.mubr.f32.gmra.mxu0 %v916
    %v1169 = vpop.f32.mrf.mxu0
    %v1170 = vadd.f32 %v846, %v1169
    %v1171 = vpop.f32.mrf.mxu0
    %1172 = vmatprep.mubr.f32.mxu0 0.0
    %1173 = vmatmul.mubr.f32.gmra.mxu0 %v919
    %v1174 = vpop.f32.mrf.mxu0
    %v1175 = vadd.f32 %v846, %v1174
    %v1176 = vpop.f32.mrf.mxu0
    %1177 = vmatprep.mubr.f32.mxu0 0.0
    %1178 = vmatmul.mubr.f32.gmra.mxu0 %v922
    %v1179 = vpop.f32.mrf.mxu0
    %v1180 = vadd.f32 %v846, %v1179
    %v1181 = vpop.f32.mrf.mxu0
    %1182 = vmatprep.mubr.f32.mxu0 0.0
    %1183 = vmatmul.mubr.f32.gmra.mxu0 %v925
    %v1184 = vpop.f32.mrf.mxu0
    %v1185 = vadd.f32 %v846, %v1184
    %v1186 = vpop.f32.mrf.mxu0
    %1187 = vmatprep.mubr.f32.mxu0 0.0
    %1188 = vmatmul.mubr.f32.gmra.mxu0 %v928
    %v1189 = vpop.f32.mrf.mxu0
    %v1190 = vadd.f32 %v846, %v1189
    %v1191 = vpop.f32.mrf.mxu0
    %1192 = vmatprep.mubr.f32.mxu0 0.0
    %1193 = vmatmul.mubr.f32.gmra.mxu0 %v931
    %v1194 = vpop.f32.mrf.mxu0
    %v1195 = vadd.f32 %v846, %v1194
    %v1196 = vpop.f32.mrf.mxu0
    %1197 = vmatprep.mubr.f32.mxu0 0.0
    %1198 = vmatmul.mubr.f32.gmra.mxu0 %v934
    %v1199 = vpop.f32.mrf.mxu0
    %v1200 = vadd.f32 %v846, %v1199
    %v1201 = vpop.f32.mrf.mxu0
    %1202 = vmatprep.mubr.f32.mxu0 0.0
    %1203 = vmatmul.mubr.f32.gmra.mxu0 %v937
    %v1204 = vpop.f32.mrf.mxu0
    %v1205 = vadd.f32 %v846, %v1204
    %v1206 = vpop.f32.mrf.mxu0
    %1207 = vmatprep.mubr.f32.mxu0 0.0
    %1208 = vmatmul.mubr.f32.gmra.mxu0 %v940
    %v1209 = vpop.f32.mrf.mxu0
    %v1210 = vadd.f32 %v846, %v1209
    %v1211 = vpop.f32.mrf.mxu0
    %1212 = vmatprep.mubr.f32.mxu0 0.0
    %1213 = vmatmul.mubr.f32.gmra.mxu0 %v943
    %v1214 = vpop.f32.mrf.mxu0
    %v1215 = vadd.f32 %v846, %v1214
    %v1216 = vpop.f32.mrf.mxu0
    %1217 = vmatprep.mubr.f32.mxu0 0.0
    %1218 = vmatmul.mubr.f32.gmra.mxu0 %v946
    %v1219 = vpop.f32.mrf.mxu0
    %v1220 = vadd.f32 %v846, %v1219
    %v1221 = vpop.f32.mrf.mxu0
    %1222 = vmatprep.mubr.f32.mxu0 0.0
    %1223 = vmatmul.mubr.f32.gmra.mxu0 %v949
    %v1224 = vpop.f32.mrf.mxu0
    %v1225 = vadd.f32 %v846, %v1224
    %v1226 = vpop.f32.mrf.mxu0
    %1227 = vmatprep.mubr.f32.mxu0 0.0
    %1228 = vmatmul.mubr.f32.gmra.mxu0 %v952
    %v1229 = vpop.f32.mrf.mxu0
    %v1230 = vadd.f32 %v846, %v1229
    %v1231 = vpop.f32.mrf.mxu0
    %1232 = vmatprep.mubr.f32.mxu0 0.0
    %1233 = vmatmul.mubr.f32.gmra.mxu0 %v955
    %v1234 = vpop.f32.mrf.mxu0
    %v1235 = vadd.f32 %v846, %v1234
    %v1236 = vpop.f32.mrf.mxu0
    %1237 = vmatprep.mubr.f32.mxu0 0.0
    %1238 = vmatmul.mubr.f32.gmra.mxu0 %v958
    %v1239 = vpop.f32.mrf.mxu0
    %v1240 = vadd.f32 %v846, %v1239
    %v1241 = vpop.f32.mrf.mxu0
    %1242 = vmatprep.mubr.f32.mxu0 0.0
    %1243 = vmatmul.mubr.f32.gmra.mxu0 %v961
    %v1244 = vpop.f32.mrf.mxu0
    %v1245 = vadd.f32 %v846, %v1244
    %v1246 = vpop.f32.mrf.mxu0
    %1247 = vmatprep.mubr.f32.mxu0 0.0
    %1248 = vmatmul.mubr.f32.gmra.mxu0 %v964
    %v1249 = vpop.f32.mrf.mxu0
    %v1250 = vadd.f32 %v846, %v1249
    %v1251 = vpop.f32.mrf.mxu0
    %1252 = vmatprep.mubr.f32.mxu0 0.0
    %1253 = vmatmul.mubr.f32.gmra.mxu0 %v967
    %v1254 = vpop.f32.mrf.mxu0
    %v1255 = vadd.f32 %v846, %v1254
    %v1256 = vpop.f32.mrf.mxu0
    %1257 = vmatprep.mubr.f32.mxu0 0.0
    %1258 = vmatmul.mubr.f32.gmra.mxu0 %v970
    %v1259 = vpop.f32.mrf.mxu0
    %v1260 = vadd.f32 %v846, %v1259
    %v1261 = vpop.f32.mrf.mxu0
    %1262 = vmatprep.mubr.f32.mxu0 0.0
    %1263 = vmatmul.mubr.f32.gmra.mxu0 %v973
    %v1264 = vpop.f32.mrf.mxu0
    %v1265 = vadd.f32 %v846, %v1264
    %v1266 = vpop.f32.mrf.mxu0
    %1267 = vmatprep.mubr.f32.mxu0 0.0
    %1268 = vmatmul.mubr.f32.gmra.mxu0 %v976
    %v1269 = vpop.f32.mrf.mxu0
    %v1270 = vadd.f32 %v846, %v1269
    %v1271 = vpop.f32.mrf.mxu0
    %1272 = vmatprep.mubr.f32.mxu0 0.0
    %1273 = vmatmul.mubr.f32.gmra.mxu0 %v979
    %v1274 = vpop.f32.mrf.mxu0
    %v1275 = vadd.f32 %v846, %v1274
    %v1276 = vpop.f32.mrf.mxu0
    %1277 = vmatprep.mubr.f32.mxu0 0.0
    %1278 = vmatmul.mubr.f32.gmra.mxu0 %v982
    %v1279 = vpop.f32.mrf.mxu0
    %v1280 = vadd.f32 %v846, %v1279
    %v1281 = vpop.f32.mrf.mxu0
    %1282 = vmatprep.mubr.f32.mxu0 0.0
    %1283 = vmatmul.mubr.f32.gmra.mxu0 %v985
    %v1284 = vpop.f32.mrf.mxu0
    %v1285 = vadd.f32 %v846, %v1284
    %v1286 = vpop.f32.mrf.mxu0
    %1287 = vmatprep.mubr.f32.mxu0 0.0
    %1288 = vmatmul.mubr.f32.gmra.mxu0 %v988
    %v1289 = vpop.f32.mrf.mxu0
    %v1290 = vadd.f32 %v846, %v1289
    %v1291 = vpop.f32.mrf.mxu0
    %1292 = vmatprep.mubr.f32.mxu0 0.0
    %1293 = vmatmul.mubr.f32.gmra.mxu0 %v991
    %v1294 = vpop.f32.mrf.mxu0
    %v1295 = vadd.f32 %v846, %v1294
    %v1296 = vpop.f32.mrf.mxu0
    %1297 = vdwg.mxu0
    %v1298 = vmax.f32 %v1060, 0.0
    %v1299 = vmax.f32 %v1065, 0.0
    %v1300 = vmax.f32 %v1070, 0.0
    %v1301 = vmax.f32 %v1075, 0.0
    %v1302 = vmax.f32 %v1080, 0.0
    %v1303 = vmax.f32 %v1085, 0.0
    %v1304 = vmax.f32 %v1090, 0.0
    %v1305 = vmax.f32 %v1095, 0.0
    %v1306 = vmax.f32 %v1100, 0.0
    %v1307 = vmax.f32 %v1105, 0.0
    %v1308 = vmax.f32 %v1110, 0.0
    %v1309 = vmax.f32 %v1115, 0.0
    %v1310 = vmax.f32 %v1120, 0.0
    %v1311 = vmax.f32 %v1125, 0.0
    %v1312 = vmax.f32 %v1130, 0.0
    %v1313 = vmax.f32 %v1135, 0.0
    %v1314 = vmax.f32 %v1140, 0.0
    %v1315 = vmax.f32 %v1145, 0.0
    %v1316 = vmax.f32 %v1150, 0.0
    %v1317 = vmax.f32 %v1155, 0.0
    %v1318 = vmax.f32 %v1160, 0.0
    %v1319 = vmax.f32 %v1165, 0.0
    %v1320 = vmax.f32 %v1170, 0.0
    %v1321 = vmax.f32 %v1175, 0.0
    %v1322 = vmax.f32 %v1180, 0.0
    %v1323 = vmax.f32 %v1185, 0.0
    %v1324 = vmax.f32 %v1190, 0.0
    %v1325 = vmax.f32 %v1195, 0.0
    %v1326 = vmax.f32 %v1200, 0.0
    %v1327 = vmax.f32 %v1205, 0.0
    %v1328 = vmax.f32 %v1210, 0.0
    %v1329 = vmax.f32 %v1215, 0.0
    %v1330 = vmax.f32 %v1220, 0.0
    %v1331 = vmax.f32 %v1225, 0.0
    %v1332 = vmax.f32 %v1230, 0.0
    %v1333 = vmax.f32 %v1235, 0.0
    %v1334 = vmax.f32 %v1240, 0.0
    %v1335 = vmax.f32 %v1245, 0.0
    %v1336 = vmax.f32 %v1250, 0.0
    %v1337 = vmax.f32 %v1255, 0.0
    %v1338 = vmax.f32 %v1260, 0.0
    %v1339 = vmax.f32 %v1265, 0.0
    %v1340 = vmax.f32 %v1270, 0.0
    %v1341 = vmax.f32 %v1275, 0.0
    %v1342 = vmax.f32 %v1280, 0.0
    %v1343 = vmax.f32 %v1285, 0.0
    %v1344 = vmax.f32 %v1290, 0.0
    %v1345 = vmax.f32 %v1295, 0.0
    %v1346 = vpack.c.bf16 %v1299, %v1298
    %v1347 = vpack.c.bf16 %v1301, %v1300
    %v1348 = vpack.c.bf16 %v1303, %v1302
    %v1349 = vpack.c.bf16 %v1305, %v1304
    %v1350 = vpack.c.bf16 %v1307, %v1306
    %v1351 = vpack.c.bf16 %v1309, %v1308
    %v1352 = vpack.c.bf16 %v1311, %v1310
    %v1353 = vpack.c.bf16 %v1313, %v1312
    %v1354 = vpack.c.bf16 %v1315, %v1314
    %v1355 = vpack.c.bf16 %v1317, %v1316
    %v1356 = vpack.c.bf16 %v1319, %v1318
    %v1357 = vpack.c.bf16 %v1321, %v1320
    %v1358 = vpack.c.bf16 %v1323, %v1322
    %v1359 = vpack.c.bf16 %v1325, %v1324
    %v1360 = vpack.c.bf16 %v1327, %v1326
    %v1361 = vpack.c.bf16 %v1329, %v1328
    %v1362 = vpack.c.bf16 %v1331, %v1330
    %v1363 = vpack.c.bf16 %v1333, %v1332
    %v1364 = vpack.c.bf16 %v1335, %v1334
    %v1365 = vpack.c.bf16 %v1337, %v1336
    %v1366 = vpack.c.bf16 %v1339, %v1338
    %v1367 = vpack.c.bf16 %v1341, %v1340
    %v1368 = vpack.c.bf16 %v1343, %v1342
    %v1369 = vpack.c.bf16 %v1345, %v1344
    %1370 = vmatprep.subr.bf16.mxu0 0
    %1371 = vmatpush1.bf16.msra.mxu0 %v1353
    %1372 = vmatprep.subr.bf16.mxu0 0
    %1373 = vmatpush1.bf16.msra.mxu0 %v1352
    %1374 = vmatprep.subr.bf16.mxu0 0
    %1375 = vmatpush1.bf16.msra.mxu0 %v1351
    %1376 = vmatprep.subr.bf16.mxu0 0
    %1377 = vmatpush1.bf16.msra.mxu0 %v1350
    %1378 = vmatprep.subr.bf16.mxu0 0
    %1379 = vmatpush1.bf16.msra.mxu0 %v1349
    %1380 = vmatprep.subr.bf16.mxu0 0
    %1381 = vmatpush1.bf16.msra.mxu0 %v1348
    %1382 = vmatprep.subr.bf16.mxu0 0
    %1383 = vmatpush1.bf16.msra.mxu0 %v1347
    %1384 = vmatprep.subr.bf16.mxu0 0
    %1385 = vmatpush1.bf16.msra.mxu0 %v1346
    %1386 = vmatprep.subr.bf16.mxu0 0
    %1387 = vmatpush2.bf16.msra.mxu0 %v1361
    %1388 = vmatprep.subr.bf16.mxu0 0
    %1389 = vmatpush2.bf16.msra.mxu0 %v1360
    %1390 = vmatprep.subr.bf16.mxu0 0
    %1391 = vmatpush2.bf16.msra.mxu0 %v1359
    %1392 = vmatprep.subr.bf16.mxu0 0
    %1393 = vmatpush2.bf16.msra.mxu0 %v1358
    %1394 = vmatprep.subr.bf16.mxu0 0
    %1395 = vmatpush2.bf16.msra.mxu0 %v1357
    %1396 = vmatprep.subr.bf16.mxu0 0
    %1397 = vmatpush2.bf16.msra.mxu0 %v1356
    %1398 = vmatprep.subr.bf16.mxu0 0
    %1399 = vmatpush2.bf16.msra.mxu0 %v1355
    %1400 = vmatprep.subr.bf16.mxu0 0
    %1401 = vmatpush2.bf16.msra.mxu0 %v1354
    %1402 = vmatprep.mubr.bf16.mxu0 %v71
    %1403 = vmatmul.mubr.bf16.gmra.mxu0 %v70
    %v1404 = vpop.f32.mrf.mxu0
    %v1405 = vadd.f32 0.0, %v1404
    %v1406 = vpop.f32.mrf.mxu0
    %v1407 = vpop.f32.mrf.mxu0
    %v1408 = vadd.f32 0.0, %v1407
    %v1409 = vpop.f32.mrf.mxu0
    %1410 = vmatprep.mubr.bf16.mxu0 %v74
    %1411 = vmatmul.mubr.bf16.gmra.mxu0 %v73
    %v1412 = vpop.f32.mrf.mxu0
    %v1413 = vadd.f32 0.0, %v1412
    %v1414 = vpop.f32.mrf.mxu0
    %v1415 = vpop.f32.mrf.mxu0
    %v1416 = vadd.f32 0.0, %v1415
    %v1417 = vpop.f32.mrf.mxu0
    %1418 = vmatprep.mubr.bf16.mxu0 %v77
    %1419 = vmatmul.mubr.bf16.gmra.mxu0 %v76
    %v1420 = vpop.f32.mrf.mxu0
    %v1421 = vadd.f32 0.0, %v1420
    %v1422 = vpop.f32.mrf.mxu0
    %v1423 = vpop.f32.mrf.mxu0
    %v1424 = vadd.f32 0.0, %v1423
    %v1425 = vpop.f32.mrf.mxu0
    %1426 = vmatprep.mubr.bf16.mxu0 %v80
    %1427 = vmatmul.mubr.bf16.gmra.mxu0 %v79
    %v1428 = vpop.f32.mrf.mxu0
    %v1429 = vadd.f32 0.0, %v1428
    %v1430 = vpop.f32.mrf.mxu0
    %v1431 = vpop.f32.mrf.mxu0
    %v1432 = vadd.f32 0.0, %v1431
    %v1433 = vpop.f32.mrf.mxu0
    %1434 = vmatprep.mubr.bf16.mxu0 %v83
    %1435 = vmatmul.mubr.bf16.gmra.mxu0 %v82
    %v1436 = vpop.f32.mrf.mxu0
    %v1437 = vadd.f32 0.0, %v1436
    %v1438 = vpop.f32.mrf.mxu0
    %v1439 = vpop.f32.mrf.mxu0
    %v1440 = vadd.f32 0.0, %v1439
    %v1441 = vpop.f32.mrf.mxu0
    %1442 = vmatprep.mubr.bf16.mxu0 %v86
    %1443 = vmatmul.mubr.bf16.gmra.mxu0 %v85
    %v1444 = vpop.f32.mrf.mxu0
    %v1445 = vadd.f32 0.0, %v1444
    %v1446 = vpop.f32.mrf.mxu0
    %v1447 = vpop.f32.mrf.mxu0
    %v1448 = vadd.f32 0.0, %v1447
    %v1449 = vpop.f32.mrf.mxu0
    %1450 = vmatprep.mubr.bf16.mxu0 %v89
    %1451 = vmatmul.mubr.bf16.gmra.mxu0 %v88
    %v1452 = vpop.f32.mrf.mxu0
    %v1453 = vadd.f32 0.0, %v1452
    %v1454 = vpop.f32.mrf.mxu0
    %v1455 = vpop.f32.mrf.mxu0
    %v1456 = vadd.f32 0.0, %v1455
    %v1457 = vpop.f32.mrf.mxu0
    %1458 = vmatprep.mubr.bf16.mxu0 %v92
    %1459 = vmatmul.mubr.bf16.gmra.mxu0 %v91
    %v1460 = vpop.f32.mrf.mxu0
    %v1461 = vadd.f32 0.0, %v1460
    %v1462 = vpop.f32.mrf.mxu0
    %v1463 = vpop.f32.mrf.mxu0
    %v1464 = vadd.f32 0.0, %v1463
    %v1465 = vpop.f32.mrf.mxu0
    %1466 = vmatprep.mubr.bf16.mxu0 %v95
    %1467 = vmatmul.mubr.bf16.gmra.mxu0 %v94
    %v1468 = vpop.f32.mrf.mxu0
    %v1469 = vadd.f32 0.0, %v1468
    %v1470 = vpop.f32.mrf.mxu0
    %v1471 = vpop.f32.mrf.mxu0
    %v1472 = vadd.f32 0.0, %v1471
    %v1473 = vpop.f32.mrf.mxu0
    %1474 = vmatprep.mubr.bf16.mxu0 %v98
    %1475 = vmatmul.mubr.bf16.gmra.mxu0 %v97
    %v1476 = vpop.f32.mrf.mxu0
    %v1477 = vadd.f32 0.0, %v1476
    %v1478 = vpop.f32.mrf.mxu0
    %v1479 = vpop.f32.mrf.mxu0
    %v1480 = vadd.f32 0.0, %v1479
    %v1481 = vpop.f32.mrf.mxu0
    %1482 = vmatprep.mubr.bf16.mxu0 %v101
    %1483 = vmatmul.mubr.bf16.gmra.mxu0 %v100
    %v1484 = vpop.f32.mrf.mxu0
    %v1485 = vadd.f32 0.0, %v1484
    %v1486 = vpop.f32.mrf.mxu0
    %v1487 = vpop.f32.mrf.mxu0
    %v1488 = vadd.f32 0.0, %v1487
    %v1489 = vpop.f32.mrf.mxu0
    %1490 = vmatprep.mubr.bf16.mxu0 %v104
    %1491 = vmatmul.mubr.bf16.gmra.mxu0 %v103
    %v1492 = vpop.f32.mrf.mxu0
    %v1493 = vadd.f32 0.0, %v1492
    %v1494 = vpop.f32.mrf.mxu0
    %v1495 = vpop.f32.mrf.mxu0
    %v1496 = vadd.f32 0.0, %v1495
    %v1497 = vpop.f32.mrf.mxu0
    %1498 = vmatprep.mubr.bf16.mxu0 %v107
    %1499 = vmatmul.mubr.bf16.gmra.mxu0 %v106
    %v1500 = vpop.f32.mrf.mxu0
    %v1501 = vadd.f32 0.0, %v1500
    %v1502 = vpop.f32.mrf.mxu0
    %v1503 = vpop.f32.mrf.mxu0
    %v1504 = vadd.f32 0.0, %v1503
    %v1505 = vpop.f32.mrf.mxu0
    %1506 = vmatprep.mubr.bf16.mxu0 %v110
    %1507 = vmatmul.mubr.bf16.gmra.mxu0 %v109
    %v1508 = vpop.f32.mrf.mxu0
    %v1509 = vadd.f32 0.0, %v1508
    %v1510 = vpop.f32.mrf.mxu0
    %v1511 = vpop.f32.mrf.mxu0
    %v1512 = vadd.f32 0.0, %v1511
    %v1513 = vpop.f32.mrf.mxu0
    %1514 = vmatprep.mubr.bf16.mxu0 %v113
    %1515 = vmatmul.mubr.bf16.gmra.mxu0 %v112
    %v1516 = vpop.f32.mrf.mxu0
    %v1517 = vadd.f32 0.0, %v1516
    %v1518 = vpop.f32.mrf.mxu0
    %v1519 = vpop.f32.mrf.mxu0
    %v1520 = vadd.f32 0.0, %v1519
    %v1521 = vpop.f32.mrf.mxu0
    %1522 = vmatprep.mubr.bf16.mxu0 %v116
    %1523 = vmatmul.mubr.bf16.gmra.mxu0 %v115
    %v1524 = vpop.f32.mrf.mxu0
    %v1525 = vadd.f32 0.0, %v1524
    %v1526 = vpop.f32.mrf.mxu0
    %v1527 = vpop.f32.mrf.mxu0
    %v1528 = vadd.f32 0.0, %v1527
    %v1529 = vpop.f32.mrf.mxu0
    %1530 = vmatprep.mubr.bf16.mxu0 %v119
    %1531 = vmatmul.mubr.bf16.gmra.mxu0 %v118
    %v1532 = vpop.f32.mrf.mxu0
    %v1533 = vadd.f32 0.0, %v1532
    %v1534 = vpop.f32.mrf.mxu0
    %v1535 = vpop.f32.mrf.mxu0
    %v1536 = vadd.f32 0.0, %v1535
    %v1537 = vpop.f32.mrf.mxu0
    %1538 = vmatprep.mubr.bf16.mxu0 %v122
    %1539 = vmatmul.mubr.bf16.gmra.mxu0 %v121
    %v1540 = vpop.f32.mrf.mxu0
    %v1541 = vadd.f32 0.0, %v1540
    %v1542 = vpop.f32.mrf.mxu0
    %v1543 = vpop.f32.mrf.mxu0
    %v1544 = vadd.f32 0.0, %v1543
    %v1545 = vpop.f32.mrf.mxu0
    %1546 = vmatprep.mubr.bf16.mxu0 %v125
    %1547 = vmatmul.mubr.bf16.gmra.mxu0 %v124
    %v1548 = vpop.f32.mrf.mxu0
    %v1549 = vadd.f32 0.0, %v1548
    %v1550 = vpop.f32.mrf.mxu0
    %v1551 = vpop.f32.mrf.mxu0
    %v1552 = vadd.f32 0.0, %v1551
    %v1553 = vpop.f32.mrf.mxu0
    %1554 = vmatprep.mubr.bf16.mxu0 %v128
    %1555 = vmatmul.mubr.bf16.gmra.mxu0 %v127
    %v1556 = vpop.f32.mrf.mxu0
    %v1557 = vadd.f32 0.0, %v1556
    %v1558 = vpop.f32.mrf.mxu0
    %v1559 = vpop.f32.mrf.mxu0
    %v1560 = vadd.f32 0.0, %v1559
    %v1561 = vpop.f32.mrf.mxu0
    %1562 = vmatprep.mubr.bf16.mxu0 %v131
    %1563 = vmatmul.mubr.bf16.gmra.mxu0 %v130
    %v1564 = vpop.f32.mrf.mxu0
    %v1565 = vadd.f32 0.0, %v1564
    %v1566 = vpop.f32.mrf.mxu0
    %v1567 = vpop.f32.mrf.mxu0
    %v1568 = vadd.f32 0.0, %v1567
    %v1569 = vpop.f32.mrf.mxu0
    %1570 = vmatprep.mubr.bf16.mxu0 %v134
    %1571 = vmatmul.mubr.bf16.gmra.mxu0 %v133
    %v1572 = vpop.f32.mrf.mxu0
    %v1573 = vadd.f32 0.0, %v1572
    %v1574 = vpop.f32.mrf.mxu0
    %v1575 = vpop.f32.mrf.mxu0
    %v1576 = vadd.f32 0.0, %v1575
    %v1577 = vpop.f32.mrf.mxu0
    %1578 = vmatprep.mubr.bf16.mxu0 %v137
    %1579 = vmatmul.mubr.bf16.gmra.mxu0 %v136
    %v1580 = vpop.f32.mrf.mxu0
    %v1581 = vadd.f32 0.0, %v1580
    %v1582 = vpop.f32.mrf.mxu0
    %v1583 = vpop.f32.mrf.mxu0
    %v1584 = vadd.f32 0.0, %v1583
    %v1585 = vpop.f32.mrf.mxu0
    %1586 = vmatprep.mubr.bf16.mxu0 %v140
    %1587 = vmatmul.mubr.bf16.gmra.mxu0 %v139
    %v1588 = vpop.f32.mrf.mxu0
    %v1589 = vadd.f32 0.0, %v1588
    %v1590 = vpop.f32.mrf.mxu0
    %v1591 = vpop.f32.mrf.mxu0
    %v1592 = vadd.f32 0.0, %v1591
    %v1593 = vpop.f32.mrf.mxu0
    %1594 = vdwg.mxu0
    %1595 = vmatprep.subr.bf16.mxu0 0
    %1596 = vmatpush1.bf16.msra.mxu0 %v1369
    %1597 = vmatprep.subr.bf16.mxu0 0
    %1598 = vmatpush1.bf16.msra.mxu0 %v1368
    %1599 = vmatprep.subr.bf16.mxu0 0
    %1600 = vmatpush1.bf16.msra.mxu0 %v1367
    %1601 = vmatprep.subr.bf16.mxu0 0
    %1602 = vmatpush1.bf16.msra.mxu0 %v1366
    %1603 = vmatprep.subr.bf16.mxu0 0
    %1604 = vmatpush1.bf16.msra.mxu0 %v1365
    %1605 = vmatprep.subr.bf16.mxu0 0
    %1606 = vmatpush1.bf16.msra.mxu0 %v1364
    %1607 = vmatprep.subr.bf16.mxu0 0
    %1608 = vmatpush1.bf16.msra.mxu0 %v1363
    %1609 = vmatprep.subr.bf16.mxu0 0
    %1610 = vmatpush1.bf16.msra.mxu0 %v1362
    %1611 = vmatprep.subr.bf16.mxu0 0
    %1612 = vmatpush2.bf16.msra.mxu0 0
    %1613 = vmatprep.subr.bf16.mxu0 0
    %1614 = vmatpush2.bf16.msra.mxu0 0
    %1615 = vmatprep.subr.bf16.mxu0 0
    %1616 = vmatpush2.bf16.msra.mxu0 0
    %1617 = vmatprep.subr.bf16.mxu0 0
    %1618 = vmatpush2.bf16.msra.mxu0 0
    %1619 = vmatprep.subr.bf16.mxu0 0
    %1620 = vmatpush2.bf16.msra.mxu0 0
    %1621 = vmatprep.subr.bf16.mxu0 0
    %1622 = vmatpush2.bf16.msra.mxu0 0
    %1623 = vmatprep.subr.bf16.mxu0 0
    %1624 = vmatpush2.bf16.msra.mxu0 0
    %1625 = vmatprep.subr.bf16.mxu0 0
    %1626 = vmatpush2.bf16.msra.mxu0 0
    %1627 = vmatprep.mubr.bf16.mxu0 0
    %1628 = vmatmul.mubr.bf16.gmra.mxu0 %v72
    %v1629 = vpop.f32.mrf.mxu0
    %v1630 = vadd.f32 %v1405, %v1629
    %v1631 = vpop.f32.mrf.mxu0
    %v1632 = vpop.f32.mrf.mxu0
    %v1633 = vadd.f32 %v1408, %v1632
    %v1634 = vpop.f32.mrf.mxu0
    %1635 = vmatprep.mubr.bf16.mxu0 0
    %1636 = vmatmul.mubr.bf16.gmra.mxu0 %v75
    %v1637 = vpop.f32.mrf.mxu0
    %v1638 = vadd.f32 %v1413, %v1637
    %v1639 = vpop.f32.mrf.mxu0
    %v1640 = vpop.f32.mrf.mxu0
    %v1641 = vadd.f32 %v1416, %v1640
    %v1642 = vpop.f32.mrf.mxu0
    %1643 = vmatprep.mubr.bf16.mxu0 0
    %1644 = vmatmul.mubr.bf16.gmra.mxu0 %v78
    %v1645 = vpop.f32.mrf.mxu0
    %v1646 = vadd.f32 %v1421, %v1645
    %v1647 = vpop.f32.mrf.mxu0
    %v1648 = vpop.f32.mrf.mxu0
    %v1649 = vadd.f32 %v1424, %v1648
    %v1650 = vpop.f32.mrf.mxu0
    %1651 = vmatprep.mubr.bf16.mxu0 0
    %1652 = vmatmul.mubr.bf16.gmra.mxu0 %v81
    %v1653 = vpop.f32.mrf.mxu0
    %v1654 = vadd.f32 %v1429, %v1653
    %v1655 = vpop.f32.mrf.mxu0
    %v1656 = vpop.f32.mrf.mxu0
    %v1657 = vadd.f32 %v1432, %v1656
    %v1658 = vpop.f32.mrf.mxu0
    %1659 = vmatprep.mubr.bf16.mxu0 0
    %1660 = vmatmul.mubr.bf16.gmra.mxu0 %v84
    %v1661 = vpop.f32.mrf.mxu0
    %v1662 = vadd.f32 %v1437, %v1661
    %v1663 = vpop.f32.mrf.mxu0
    %v1664 = vpop.f32.mrf.mxu0
    %v1665 = vadd.f32 %v1440, %v1664
    %v1666 = vpop.f32.mrf.mxu0
    %1667 = vmatprep.mubr.bf16.mxu0 0
    %1668 = vmatmul.mubr.bf16.gmra.mxu0 %v87
    %v1669 = vpop.f32.mrf.mxu0
    %v1670 = vadd.f32 %v1445, %v1669
    %v1671 = vpop.f32.mrf.mxu0
    %v1672 = vpop.f32.mrf.mxu0
    %v1673 = vadd.f32 %v1448, %v1672
    %v1674 = vpop.f32.mrf.mxu0
    %1675 = vmatprep.mubr.bf16.mxu0 0
    %1676 = vmatmul.mubr.bf16.gmra.mxu0 %v90
    %v1677 = vpop.f32.mrf.mxu0
    %v1678 = vadd.f32 %v1453, %v1677
    %v1679 = vpop.f32.mrf.mxu0
    %v1680 = vpop.f32.mrf.mxu0
    %v1681 = vadd.f32 %v1456, %v1680
    %v1682 = vpop.f32.mrf.mxu0
    %1683 = vmatprep.mubr.bf16.mxu0 0
    %1684 = vmatmul.mubr.bf16.gmra.mxu0 %v93
    %v1685 = vpop.f32.mrf.mxu0
    %v1686 = vadd.f32 %v1461, %v1685
    %v1687 = vpop.f32.mrf.mxu0
    %v1688 = vpop.f32.mrf.mxu0
    %v1689 = vadd.f32 %v1464, %v1688
    %v1690 = vpop.f32.mrf.mxu0
    %1691 = vmatprep.mubr.bf16.mxu0 0
    %1692 = vmatmul.mubr.bf16.gmra.mxu0 %v96
    %v1693 = vpop.f32.mrf.mxu0
    %v1694 = vadd.f32 %v1469, %v1693
    %v1695 = vpop.f32.mrf.mxu0
    %v1696 = vpop.f32.mrf.mxu0
    %v1697 = vadd.f32 %v1472, %v1696
    %v1698 = vpop.f32.mrf.mxu0
    %1699 = vmatprep.mubr.bf16.mxu0 0
    %1700 = vmatmul.mubr.bf16.gmra.mxu0 %v99
    %v1701 = vpop.f32.mrf.mxu0
    %v1702 = vadd.f32 %v1477, %v1701
    %v1703 = vpop.f32.mrf.mxu0
    %v1704 = vpop.f32.mrf.mxu0
    %v1705 = vadd.f32 %v1480, %v1704
    %v1706 = vpop.f32.mrf.mxu0
    %1707 = vmatprep.mubr.bf16.mxu0 0
    %1708 = vmatmul.mubr.bf16.gmra.mxu0 %v102
    %v1709 = vpop.f32.mrf.mxu0
    %v1710 = vadd.f32 %v1485, %v1709
    %v1711 = vpop.f32.mrf.mxu0
    %v1712 = vpop.f32.mrf.mxu0
    %v1713 = vadd.f32 %v1488, %v1712
    %v1714 = vpop.f32.mrf.mxu0
    %1715 = vmatprep.mubr.bf16.mxu0 0
    %1716 = vmatmul.mubr.bf16.gmra.mxu0 %v105
    %v1717 = vpop.f32.mrf.mxu0
    %v1718 = vadd.f32 %v1493, %v1717
    %v1719 = vpop.f32.mrf.mxu0
    %v1720 = vpop.f32.mrf.mxu0
    %v1721 = vadd.f32 %v1496, %v1720
    %v1722 = vpop.f32.mrf.mxu0
    %1723 = vmatprep.mubr.bf16.mxu0 0
    %1724 = vmatmul.mubr.bf16.gmra.mxu0 %v108
    %v1725 = vpop.f32.mrf.mxu0
    %v1726 = vadd.f32 %v1501, %v1725
    %v1727 = vpop.f32.mrf.mxu0
    %v1728 = vpop.f32.mrf.mxu0
    %v1729 = vadd.f32 %v1504, %v1728
    %v1730 = vpop.f32.mrf.mxu0
    %1731 = vmatprep.mubr.bf16.mxu0 0
    %1732 = vmatmul.mubr.bf16.gmra.mxu0 %v111
    %v1733 = vpop.f32.mrf.mxu0
    %v1734 = vadd.f32 %v1509, %v1733
    %v1735 = vpop.f32.mrf.mxu0
    %v1736 = vpop.f32.mrf.mxu0
    %v1737 = vadd.f32 %v1512, %v1736
    %v1738 = vpop.f32.mrf.mxu0
    %1739 = vmatprep.mubr.bf16.mxu0 0
    %1740 = vmatmul.mubr.bf16.gmra.mxu0 %v114
    %v1741 = vpop.f32.mrf.mxu0
    %v1742 = vadd.f32 %v1517, %v1741
    %v1743 = vpop.f32.mrf.mxu0
    %v1744 = vpop.f32.mrf.mxu0
    %v1745 = vadd.f32 %v1520, %v1744
    %v1746 = vpop.f32.mrf.mxu0
    %1747 = vmatprep.mubr.bf16.mxu0 0
    %1748 = vmatmul.mubr.bf16.gmra.mxu0 %v117
    %v1749 = vpop.f32.mrf.mxu0
    %v1750 = vadd.f32 %v1525, %v1749
    %v1751 = vpop.f32.mrf.mxu0
    %v1752 = vpop.f32.mrf.mxu0
    %v1753 = vadd.f32 %v1528, %v1752
    %v1754 = vpop.f32.mrf.mxu0
    %1755 = vmatprep.mubr.bf16.mxu0 0
    %1756 = vmatmul.mubr.bf16.gmra.mxu0 %v120
    %v1757 = vpop.f32.mrf.mxu0
    %v1758 = vadd.f32 %v1533, %v1757
    %v1759 = vpop.f32.mrf.mxu0
    %v1760 = vpop.f32.mrf.mxu0
    %v1761 = vadd.f32 %v1536, %v1760
    %v1762 = vpop.f32.mrf.mxu0
    %1763 = vmatprep.mubr.bf16.mxu0 0
    %1764 = vmatmul.mubr.bf16.gmra.mxu0 %v123
    %v1765 = vpop.f32.mrf.mxu0
    %v1766 = vadd.f32 %v1541, %v1765
    %v1767 = vpop.f32.mrf.mxu0
    %v1768 = vpop.f32.mrf.mxu0
    %v1769 = vadd.f32 %v1544, %v1768
    %v1770 = vpop.f32.mrf.mxu0
    %1771 = vmatprep.mubr.bf16.mxu0 0
    %1772 = vmatmul.mubr.bf16.gmra.mxu0 %v126
    %v1773 = vpop.f32.mrf.mxu0
    %v1774 = vadd.f32 %v1549, %v1773
    %v1775 = vpop.f32.mrf.mxu0
    %v1776 = vpop.f32.mrf.mxu0
    %v1777 = vadd.f32 %v1552, %v1776
    %v1778 = vpop.f32.mrf.mxu0
    %1779 = vmatprep.mubr.bf16.mxu0 0
    %1780 = vmatmul.mubr.bf16.gmra.mxu0 %v129
    %v1781 = vpop.f32.mrf.mxu0
    %v1782 = vadd.f32 %v1557, %v1781
    %v1783 = vpop.f32.mrf.mxu0
    %v1784 = vpop.f32.mrf.mxu0
    %v1785 = vadd.f32 %v1560, %v1784
    %v1786 = vpop.f32.mrf.mxu0
    %1787 = vmatprep.mubr.bf16.mxu0 0
    %1788 = vmatmul.mubr.bf16.gmra.mxu0 %v132
    %v1789 = vpop.f32.mrf.mxu0
    %v1790 = vadd.f32 %v1565, %v1789
    %v1791 = vpop.f32.mrf.mxu0
    %v1792 = vpop.f32.mrf.mxu0
    %v1793 = vadd.f32 %v1568, %v1792
    %v1794 = vpop.f32.mrf.mxu0
    %1795 = vmatprep.mubr.bf16.mxu0 0
    %1796 = vmatmul.mubr.bf16.gmra.mxu0 %v135
    %v1797 = vpop.f32.mrf.mxu0
    %v1798 = vadd.f32 %v1573, %v1797
    %v1799 = vpop.f32.mrf.mxu0
    %v1800 = vpop.f32.mrf.mxu0
    %v1801 = vadd.f32 %v1576, %v1800
    %v1802 = vpop.f32.mrf.mxu0
    %1803 = vmatprep.mubr.bf16.mxu0 0
    %1804 = vmatmul.mubr.bf16.gmra.mxu0 %v138
    %v1805 = vpop.f32.mrf.mxu0
    %v1806 = vadd.f32 %v1581, %v1805
    %v1807 = vpop.f32.mrf.mxu0
    %v1808 = vpop.f32.mrf.mxu0
    %v1809 = vadd.f32 %v1584, %v1808
    %v1810 = vpop.f32.mrf.mxu0
    %1811 = vmatprep.mubr.bf16.mxu0 0
    %1812 = vmatmul.mubr.bf16.gmra.mxu0 %v141
    %v1813 = vpop.f32.mrf.mxu0
    %v1814 = vadd.f32 %v1589, %v1813
    %v1815 = vpop.f32.mrf.mxu0
    %v1816 = vpop.f32.mrf.mxu0
    %v1817 = vadd.f32 %v1592, %v1816
    %v1818 = vpop.f32.mrf.mxu0
    %1819 = vdwg.mxu0
    %v1820 = vld [vmem:[%s5] sm:$0xff]
    %v1821 = vld [vmem:[%s5 + $0x8] sm:$0xff]
    %v1822 = vld [vmem:[%s5 + $0x10] sm:$0xff]
    %v1823 = vld [vmem:[%s5 + $0x18] sm:$0xff]
    %v1824 = vld [vmem:[%s5 + $0x20] sm:$0xff]
    %v1825 = vld [vmem:[%s5 + $0x28] sm:$0xff]
    %v1826 = vld [vmem:[%s5 + $0x30] sm:$0xff]
    %v1827 = vld [vmem:[%s5 + $0x38] sm:$0xff]
    %v1828 = vld [vmem:[%s5 + $0x40] sm:$0xff]
    %v1829 = vld [vmem:[%s5 + $0x48] sm:$0xff]
    %v1830 = vld [vmem:[%s5 + $0x50] sm:$0xff]
    %v1831 = vld [vmem:[%s5 + $0x58] sm:$0xff]
    %v1832 = vld [vmem:[%s5 + $0x60] sm:$0xff]
    %v1833 = vld [vmem:[%s5 + $0x68] sm:$0xff]
    %v1834 = vld [vmem:[%s5 + $0x70] sm:$0xff]
    %v1835 = vld [vmem:[%s5 + $0x78] sm:$0xff]
    %v1836 = vld [vmem:[%s6] sm:$0x1]
    %v1837 = vld [vmem:[%s7] sm:$0xff]
    %v1838 = vld [vmem:[%s7 + $0x8] sm:$0xff]
    %v1839 = vld [vmem:[%s8] sm:$0x1]
    %v1841 = vlaneseq
    %v1842 = vshrl.u32 %v1841, 7
    %v1843 = vsub.s32 0, %v1842
    %v1844 = vrot.slane %v1836, %v1843
    %1846 = vmatprep.subr.mxu0 0.0
    %1847 = vmatpush1.msra.mxu0 %v1835
    %1848 = vmatprep.subr.mxu0 0.0
    %1849 = vmatpush1.msra.mxu0 %v1834
    %1850 = vmatprep.subr.mxu0 0.0
    %1851 = vmatpush1.msra.mxu0 %v1833
    %1852 = vmatprep.subr.mxu0 0.0
    %1853 = vmatpush1.msra.mxu0 %v1832
    %1854 = vmatprep.subr.mxu0 0.0
    %1855 = vmatpush1.msra.mxu0 %v1831
    %1856 = vmatprep.subr.mxu0 0.0
    %1857 = vmatpush1.msra.mxu0 %v1830
    %1858 = vmatprep.subr.mxu0 0.0
    %1859 = vmatpush1.msra.mxu0 %v1829
    %1860 = vmatprep.subr.mxu0 0.0
    %1861 = vmatpush1.msra.mxu0 %v1828
    %1862 = vmatprep.subr.mxu0 0.0
    %1863 = vmatpush1.msra.mxu0 %v1827
    %1864 = vmatprep.subr.mxu0 0.0
    %1865 = vmatpush1.msra.mxu0 %v1826
    %1866 = vmatprep.subr.mxu0 0.0
    %1867 = vmatpush1.msra.mxu0 %v1825
    %1868 = vmatprep.subr.mxu0 0.0
    %1869 = vmatpush1.msra.mxu0 %v1824
    %1870 = vmatprep.subr.mxu0 0.0
    %1871 = vmatpush1.msra.mxu0 %v1823
    %1872 = vmatprep.subr.mxu0 0.0
    %1873 = vmatpush1.msra.mxu0 %v1822
    %1874 = vmatprep.subr.mxu0 0.0
    %1875 = vmatpush1.msra.mxu0 %v1821
    %1876 = vmatprep.subr.mxu0 0.0
    %1877 = vmatpush1.msra.mxu0 %v1820
    %1878 = vmatprep.subr.mxu0 0.0
    %1879 = vmatpush2.msra.mxu0 0.0
    %1880 = vmatprep.subr.mxu0 0.0
    %1881 = vmatpush2.msra.mxu0 0.0
    %1882 = vmatprep.subr.mxu0 0.0
    %1883 = vmatpush2.msra.mxu0 0.0
    %1884 = vmatprep.subr.mxu0 0.0
    %1885 = vmatpush2.msra.mxu0 0.0
    %1886 = vmatprep.subr.mxu0 0.0
    %1887 = vmatpush2.msra.mxu0 0.0
    %1888 = vmatprep.subr.mxu0 0.0
    %1889 = vmatpush2.msra.mxu0 0.0
    %1890 = vmatprep.subr.mxu0 0.0
    %1891 = vmatpush2.msra.mxu0 0.0
    %1892 = vmatprep.subr.mxu0 0.0
    %1893 = vmatpush2.msra.mxu0 0.0
    %1894 = vmatprep.subr.mxu0 0.0
    %1895 = vmatpush2.msra.mxu0 0.0
    %1896 = vmatprep.subr.mxu0 0.0
    %1897 = vmatpush2.msra.mxu0 0.0
    %1898 = vmatprep.subr.mxu0 0.0
    %1899 = vmatpush2.msra.mxu0 0.0
    %1900 = vmatprep.subr.mxu0 0.0
    %1901 = vmatpush2.msra.mxu0 0.0
    %1902 = vmatprep.subr.mxu0 0.0
    %1903 = vmatpush2.msra.mxu0 0.0
    %1904 = vmatprep.subr.mxu0 0.0
    %1905 = vmatpush2.msra.mxu0 0.0
    %1906 = vmatprep.subr.mxu0 0.0
    %1907 = vmatpush2.msra.mxu0 0.0
    %1908 = vmatprep.subr.mxu0 0.0
    %1909 = vmatpush2.msra.mxu0 0.0
    %1910 = vmatprep.mubr.f32.mxu0 0.0
    %1911 = vmatmul.mubr.f32.gmra.mxu0 %v1630
    %v1912 = vpop.f32.mrf.mxu0
    %v1913 = vadd.f32 %v1844, %v1912
    %v1914 = vpop.f32.mrf.mxu0
    %1915 = vmatprep.mubr.f32.mxu0 0.0
    %1916 = vmatmul.mubr.f32.gmra.mxu0 %v1633
    %v1917 = vpop.f32.mrf.mxu0
    %v1918 = vadd.f32 %v1844, %v1917
    %v1919 = vpop.f32.mrf.mxu0
    %1920 = vmatprep.mubr.f32.mxu0 0.0
    %1921 = vmatmul.mubr.f32.gmra.mxu0 %v1638
    %v1922 = vpop.f32.mrf.mxu0
    %v1923 = vadd.f32 %v1844, %v1922
    %v1924 = vpop.f32.mrf.mxu0
    %1925 = vmatprep.mubr.f32.mxu0 0.0
    %1926 = vmatmul.mubr.f32.gmra.mxu0 %v1641
    %v1927 = vpop.f32.mrf.mxu0
    %v1928 = vadd.f32 %v1844, %v1927
    %v1929 = vpop.f32.mrf.mxu0
    %1930 = vmatprep.mubr.f32.mxu0 0.0
    %1931 = vmatmul.mubr.f32.gmra.mxu0 %v1646
    %v1932 = vpop.f32.mrf.mxu0
    %v1933 = vadd.f32 %v1844, %v1932
    %v1934 = vpop.f32.mrf.mxu0
    %1935 = vmatprep.mubr.f32.mxu0 0.0
    %1936 = vmatmul.mubr.f32.gmra.mxu0 %v1649
    %v1937 = vpop.f32.mrf.mxu0
    %v1938 = vadd.f32 %v1844, %v1937
    %v1939 = vpop.f32.mrf.mxu0
    %1940 = vmatprep.mubr.f32.mxu0 0.0
    %1941 = vmatmul.mubr.f32.gmra.mxu0 %v1654
    %v1942 = vpop.f32.mrf.mxu0
    %v1943 = vadd.f32 %v1844, %v1942
    %v1944 = vpop.f32.mrf.mxu0
    %1945 = vmatprep.mubr.f32.mxu0 0.0
    %1946 = vmatmul.mubr.f32.gmra.mxu0 %v1657
    %v1947 = vpop.f32.mrf.mxu0
    %v1948 = vadd.f32 %v1844, %v1947
    %v1949 = vpop.f32.mrf.mxu0
    %1950 = vmatprep.mubr.f32.mxu0 0.0
    %1951 = vmatmul.mubr.f32.gmra.mxu0 %v1662
    %v1952 = vpop.f32.mrf.mxu0
    %v1953 = vadd.f32 %v1844, %v1952
    %v1954 = vpop.f32.mrf.mxu0
    %1955 = vmatprep.mubr.f32.mxu0 0.0
    %1956 = vmatmul.mubr.f32.gmra.mxu0 %v1665
    %v1957 = vpop.f32.mrf.mxu0
    %v1958 = vadd.f32 %v1844, %v1957
    %v1959 = vpop.f32.mrf.mxu0
    %1960 = vmatprep.mubr.f32.mxu0 0.0
    %1961 = vmatmul.mubr.f32.gmra.mxu0 %v1670
    %v1962 = vpop.f32.mrf.mxu0
    %v1963 = vadd.f32 %v1844, %v1962
    %v1964 = vpop.f32.mrf.mxu0
    %1965 = vmatprep.mubr.f32.mxu0 0.0
    %1966 = vmatmul.mubr.f32.gmra.mxu0 %v1673
    %v1967 = vpop.f32.mrf.mxu0
    %v1968 = vadd.f32 %v1844, %v1967
    %v1969 = vpop.f32.mrf.mxu0
    %1970 = vmatprep.mubr.f32.mxu0 0.0
    %1971 = vmatmul.mubr.f32.gmra.mxu0 %v1678
    %v1972 = vpop.f32.mrf.mxu0
    %v1973 = vadd.f32 %v1844, %v1972
    %v1974 = vpop.f32.mrf.mxu0
    %1975 = vmatprep.mubr.f32.mxu0 0.0
    %1976 = vmatmul.mubr.f32.gmra.mxu0 %v1681
    %v1977 = vpop.f32.mrf.mxu0
    %v1978 = vadd.f32 %v1844, %v1977
    %v1979 = vpop.f32.mrf.mxu0
    %1980 = vmatprep.mubr.f32.mxu0 0.0
    %1981 = vmatmul.mubr.f32.gmra.mxu0 %v1686
    %v1982 = vpop.f32.mrf.mxu0
    %v1983 = vadd.f32 %v1844, %v1982
    %v1984 = vpop.f32.mrf.mxu0
    %1985 = vmatprep.mubr.f32.mxu0 0.0
    %1986 = vmatmul.mubr.f32.gmra.mxu0 %v1689
    %v1987 = vpop.f32.mrf.mxu0
    %v1988 = vadd.f32 %v1844, %v1987
    %v1989 = vpop.f32.mrf.mxu0
    %1990 = vmatprep.mubr.f32.mxu0 0.0
    %1991 = vmatmul.mubr.f32.gmra.mxu0 %v1694
    %v1992 = vpop.f32.mrf.mxu0
    %v1993 = vadd.f32 %v1844, %v1992
    %v1994 = vpop.f32.mrf.mxu0
    %1995 = vmatprep.mubr.f32.mxu0 0.0
    %1996 = vmatmul.mubr.f32.gmra.mxu0 %v1697
    %v1997 = vpop.f32.mrf.mxu0
    %v1998 = vadd.f32 %v1844, %v1997
    %v1999 = vpop.f32.mrf.mxu0
    %2000 = vmatprep.mubr.f32.mxu0 0.0
    %2001 = vmatmul.mubr.f32.gmra.mxu0 %v1702
    %v2002 = vpop.f32.mrf.mxu0
    %v2003 = vadd.f32 %v1844, %v2002
    %v2004 = vpop.f32.mrf.mxu0
    %2005 = vmatprep.mubr.f32.mxu0 0.0
    %2006 = vmatmul.mubr.f32.gmra.mxu0 %v1705
    %v2007 = vpop.f32.mrf.mxu0
    %v2008 = vadd.f32 %v1844, %v2007
    %v2009 = vpop.f32.mrf.mxu0
    %2010 = vmatprep.mubr.f32.mxu0 0.0
    %2011 = vmatmul.mubr.f32.gmra.mxu0 %v1710
    %v2012 = vpop.f32.mrf.mxu0
    %v2013 = vadd.f32 %v1844, %v2012
    %v2014 = vpop.f32.mrf.mxu0
    %2015 = vmatprep.mubr.f32.mxu0 0.0
    %2016 = vmatmul.mubr.f32.gmra.mxu0 %v1713
    %v2017 = vpop.f32.mrf.mxu0
    %v2018 = vadd.f32 %v1844, %v2017
    %v2019 = vpop.f32.mrf.mxu0
    %2020 = vmatprep.mubr.f32.mxu0 0.0
    %2021 = vmatmul.mubr.f32.gmra.mxu0 %v1718
    %v2022 = vpop.f32.mrf.mxu0
    %v2023 = vadd.f32 %v1844, %v2022
    %v2024 = vpop.f32.mrf.mxu0
    %2025 = vmatprep.mubr.f32.mxu0 0.0
    %2026 = vmatmul.mubr.f32.gmra.mxu0 %v1721
    %v2027 = vpop.f32.mrf.mxu0
    %v2028 = vadd.f32 %v1844, %v2027
    %v2029 = vpop.f32.mrf.mxu0
    %2030 = vmatprep.mubr.f32.mxu0 0.0
    %2031 = vmatmul.mubr.f32.gmra.mxu0 %v1726
    %v2032 = vpop.f32.mrf.mxu0
    %v2033 = vadd.f32 %v1844, %v2032
    %v2034 = vpop.f32.mrf.mxu0
    %2035 = vmatprep.mubr.f32.mxu0 0.0
    %2036 = vmatmul.mubr.f32.gmra.mxu0 %v1729
    %v2037 = vpop.f32.mrf.mxu0
    %v2038 = vadd.f32 %v1844, %v2037
    %v2039 = vpop.f32.mrf.mxu0
    %2040 = vmatprep.mubr.f32.mxu0 0.0
    %2041 = vmatmul.mubr.f32.gmra.mxu0 %v1734
    %v2042 = vpop.f32.mrf.mxu0
    %v2043 = vadd.f32 %v1844, %v2042
    %v2044 = vpop.f32.mrf.mxu0
    %2045 = vmatprep.mubr.f32.mxu0 0.0
    %2046 = vmatmul.mubr.f32.gmra.mxu0 %v1737
    %v2047 = vpop.f32.mrf.mxu0
    %v2048 = vadd.f32 %v1844, %v2047
    %v2049 = vpop.f32.mrf.mxu0
    %2050 = vmatprep.mubr.f32.mxu0 0.0
    %2051 = vmatmul.mubr.f32.gmra.mxu0 %v1742
    %v2052 = vpop.f32.mrf.mxu0
    %v2053 = vadd.f32 %v1844, %v2052
    %v2054 = vpop.f32.mrf.mxu0
    %2055 = vmatprep.mubr.f32.mxu0 0.0
    %2056 = vmatmul.mubr.f32.gmra.mxu0 %v1745
    %v2057 = vpop.f32.mrf.mxu0
    %v2058 = vadd.f32 %v1844, %v2057
    %v2059 = vpop.f32.mrf.mxu0
    %2060 = vmatprep.mubr.f32.mxu0 0.0
    %2061 = vmatmul.mubr.f32.gmra.mxu0 %v1750
    %v2062 = vpop.f32.mrf.mxu0
    %v2063 = vadd.f32 %v1844, %v2062
    %v2064 = vpop.f32.mrf.mxu0
    %2065 = vmatprep.mubr.f32.mxu0 0.0
    %2066 = vmatmul.mubr.f32.gmra.mxu0 %v1753
    %v2067 = vpop.f32.mrf.mxu0
    %v2068 = vadd.f32 %v1844, %v2067
    %v2069 = vpop.f32.mrf.mxu0
    %2070 = vmatprep.mubr.f32.mxu0 0.0
    %2071 = vmatmul.mubr.f32.gmra.mxu0 %v1758
    %v2072 = vpop.f32.mrf.mxu0
    %v2073 = vadd.f32 %v1844, %v2072
    %v2074 = vpop.f32.mrf.mxu0
    %2075 = vmatprep.mubr.f32.mxu0 0.0
    %2076 = vmatmul.mubr.f32.gmra.mxu0 %v1761
    %v2077 = vpop.f32.mrf.mxu0
    %v2078 = vadd.f32 %v1844, %v2077
    %v2079 = vpop.f32.mrf.mxu0
    %2080 = vmatprep.mubr.f32.mxu0 0.0
    %2081 = vmatmul.mubr.f32.gmra.mxu0 %v1766
    %v2082 = vpop.f32.mrf.mxu0
    %v2083 = vadd.f32 %v1844, %v2082
    %v2084 = vpop.f32.mrf.mxu0
    %2085 = vmatprep.mubr.f32.mxu0 0.0
    %2086 = vmatmul.mubr.f32.gmra.mxu0 %v1769
    %v2087 = vpop.f32.mrf.mxu0
    %v2088 = vadd.f32 %v1844, %v2087
    %v2089 = vpop.f32.mrf.mxu0
    %2090 = vmatprep.mubr.f32.mxu0 0.0
    %2091 = vmatmul.mubr.f32.gmra.mxu0 %v1774
    %v2092 = vpop.f32.mrf.mxu0
    %v2093 = vadd.f32 %v1844, %v2092
    %v2094 = vpop.f32.mrf.mxu0
    %2095 = vmatprep.mubr.f32.mxu0 0.0
    %2096 = vmatmul.mubr.f32.gmra.mxu0 %v1777
    %v2097 = vpop.f32.mrf.mxu0
    %v2098 = vadd.f32 %v1844, %v2097
    %v2099 = vpop.f32.mrf.mxu0
    %2100 = vmatprep.mubr.f32.mxu0 0.0
    %2101 = vmatmul.mubr.f32.gmra.mxu0 %v1782
    %v2102 = vpop.f32.mrf.mxu0
    %v2103 = vadd.f32 %v1844, %v2102
    %v2104 = vpop.f32.mrf.mxu0
    %2105 = vmatprep.mubr.f32.mxu0 0.0
    %2106 = vmatmul.mubr.f32.gmra.mxu0 %v1785
    %v2107 = vpop.f32.mrf.mxu0
    %v2108 = vadd.f32 %v1844, %v2107
    %v2109 = vpop.f32.mrf.mxu0
    %2110 = vmatprep.mubr.f32.mxu0 0.0
    %2111 = vmatmul.mubr.f32.gmra.mxu0 %v1790
    %v2112 = vpop.f32.mrf.mxu0
    %v2113 = vadd.f32 %v1844, %v2112
    %v2114 = vpop.f32.mrf.mxu0
    %2115 = vmatprep.mubr.f32.mxu0 0.0
    %2116 = vmatmul.mubr.f32.gmra.mxu0 %v1793
    %v2117 = vpop.f32.mrf.mxu0
    %v2118 = vadd.f32 %v1844, %v2117
    %v2119 = vpop.f32.mrf.mxu0
    %2120 = vmatprep.mubr.f32.mxu0 0.0
    %2121 = vmatmul.mubr.f32.gmra.mxu0 %v1798
    %v2122 = vpop.f32.mrf.mxu0
    %v2123 = vadd.f32 %v1844, %v2122
    %v2124 = vpop.f32.mrf.mxu0
    %2125 = vmatprep.mubr.f32.mxu0 0.0
    %2126 = vmatmul.mubr.f32.gmra.mxu0 %v1801
    %v2127 = vpop.f32.mrf.mxu0
    %v2128 = vadd.f32 %v1844, %v2127
    %v2129 = vpop.f32.mrf.mxu0
    %2130 = vmatprep.mubr.f32.mxu0 0.0
    %2131 = vmatmul.mubr.f32.gmra.mxu0 %v1806
    %v2132 = vpop.f32.mrf.mxu0
    %v2133 = vadd.f32 %v1844, %v2132
    %v2134 = vpop.f32.mrf.mxu0
    %2135 = vmatprep.mubr.f32.mxu0 0.0
    %2136 = vmatmul.mubr.f32.gmra.mxu0 %v1809
    %v2137 = vpop.f32.mrf.mxu0
    %v2138 = vadd.f32 %v1844, %v2137
    %v2139 = vpop.f32.mrf.mxu0
    %2140 = vmatprep.mubr.f32.mxu0 0.0
    %2141 = vmatmul.mubr.f32.gmra.mxu0 %v1814
    %v2142 = vpop.f32.mrf.mxu0
    %v2143 = vadd.f32 %v1844, %v2142
    %v2144 = vpop.f32.mrf.mxu0
    %2145 = vmatprep.mubr.f32.mxu0 0.0
    %2146 = vmatmul.mubr.f32.gmra.mxu0 %v1817
    %v2147 = vpop.f32.mrf.mxu0
    %v2148 = vadd.f32 %v1844, %v2147
    %v2149 = vpop.f32.mrf.mxu0
    %2150 = vdwg.mxu0
    %v2151 = vmax.f32 %v1913, 0.0
    %v2152 = vmax.f32 %v1918, 0.0
    %v2153 = vmax.f32 %v1923, 0.0
    %v2154 = vmax.f32 %v1928, 0.0
    %v2155 = vmax.f32 %v1933, 0.0
    %v2156 = vmax.f32 %v1938, 0.0
    %v2157 = vmax.f32 %v1943, 0.0
    %v2158 = vmax.f32 %v1948, 0.0
    %v2159 = vmax.f32 %v1953, 0.0
    %v2160 = vmax.f32 %v1958, 0.0
    %v2161 = vmax.f32 %v1963, 0.0
    %v2162 = vmax.f32 %v1968, 0.0
    %v2163 = vmax.f32 %v1973, 0.0
    %v2164 = vmax.f32 %v1978, 0.0
    %v2165 = vmax.f32 %v1983, 0.0
    %v2166 = vmax.f32 %v1988, 0.0
    %v2167 = vmax.f32 %v1993, 0.0
    %v2168 = vmax.f32 %v1998, 0.0
    %v2169 = vmax.f32 %v2003, 0.0
    %v2170 = vmax.f32 %v2008, 0.0
    %v2171 = vmax.f32 %v2013, 0.0
    %v2172 = vmax.f32 %v2018, 0.0
    %v2173 = vmax.f32 %v2023, 0.0
    %v2174 = vmax.f32 %v2028, 0.0
    %v2175 = vmax.f32 %v2033, 0.0
    %v2176 = vmax.f32 %v2038, 0.0
    %v2177 = vmax.f32 %v2043, 0.0
    %v2178 = vmax.f32 %v2048, 0.0
    %v2179 = vmax.f32 %v2053, 0.0
    %v2180 = vmax.f32 %v2058, 0.0
    %v2181 = vmax.f32 %v2063, 0.0
    %v2182 = vmax.f32 %v2068, 0.0
    %v2183 = vmax.f32 %v2073, 0.0
    %v2184 = vmax.f32 %v2078, 0.0
    %v2185 = vmax.f32 %v2083, 0.0
    %v2186 = vmax.f32 %v2088, 0.0
    %v2187 = vmax.f32 %v2093, 0.0
    %v2188 = vmax.f32 %v2098, 0.0
    %v2189 = vmax.f32 %v2103, 0.0
    %v2190 = vmax.f32 %v2108, 0.0
    %v2191 = vmax.f32 %v2113, 0.0
    %v2192 = vmax.f32 %v2118, 0.0
    %v2193 = vmax.f32 %v2123, 0.0
    %v2194 = vmax.f32 %v2128, 0.0
    %v2195 = vmax.f32 %v2133, 0.0
    %v2196 = vmax.f32 %v2138, 0.0
    %v2197 = vmax.f32 %v2143, 0.0
    %v2198 = vmax.f32 %v2148, 0.0
    %v2200 = vlaneseq
    %v2201 = vshrl.u32 %v2200, 7
    %v2202 = vsub.s32 0, %v2201
    %v2203 = vrot.slane %v1839, %v2202
    %v2206 = vsel %vm848, %v2151, 0
    %v2209 = vsel %vm848, %v2152, 0
    %v2212 = vsel %vm848, %v2153, 0
    %v2215 = vsel %vm848, %v2154, 0
    %v2218 = vsel %vm848, %v2155, 0
    %v2221 = vsel %vm848, %v2156, 0
    %v2224 = vsel %vm848, %v2157, 0
    %v2227 = vsel %vm848, %v2158, 0
    %v2230 = vsel %vm848, %v2159, 0
    %v2233 = vsel %vm848, %v2160, 0
    %v2236 = vsel %vm848, %v2161, 0
    %v2239 = vsel %vm848, %v2162, 0
    %v2242 = vsel %vm848, %v2163, 0
    %v2245 = vsel %vm848, %v2164, 0
    %v2248 = vsel %vm848, %v2165, 0
    %v2251 = vsel %vm848, %v2166, 0
    %v2254 = vsel %vm848, %v2167, 0
    %v2257 = vsel %vm848, %v2168, 0
    %v2260 = vsel %vm848, %v2169, 0
    %v2263 = vsel %vm848, %v2170, 0
    %v2266 = vsel %vm848, %v2171, 0
    %v2269 = vsel %vm848, %v2172, 0
    %v2272 = vsel %vm848, %v2173, 0
    %v2275 = vsel %vm848, %v2174, 0
    %v2278 = vsel %vm848, %v2175, 0
    %v2281 = vsel %vm848, %v2176, 0
    %v2284 = vsel %vm848, %v2177, 0
    %v2287 = vsel %vm848, %v2178, 0
    %v2290 = vsel %vm848, %v2179, 0
    %v2293 = vsel %vm848, %v2180, 0
    %v2296 = vsel %vm848, %v2181, 0
    %v2299 = vsel %vm848, %v2182, 0
    %v2302 = vsel %vm848, %v2183, 0
    %v2305 = vsel %vm848, %v2184, 0
    %v2308 = vsel %vm848, %v2185, 0
    %v2311 = vsel %vm848, %v2186, 0
    %v2314 = vsel %vm848, %v2187, 0
    %v2317 = vsel %vm848, %v2188, 0
    %v2320 = vsel %vm848, %v2189, 0
    %v2323 = vsel %vm848, %v2190, 0
    %v2326 = vsel %vm848, %v2191, 0
    %v2329 = vsel %vm848, %v2192, 0
    %v2332 = vsel %vm848, %v2193, 0
    %v2335 = vsel %vm848, %v2194, 0
    %v2338 = vsel %vm848, %v2195, 0
    %v2341 = vsel %vm848, %v2196, 0
    %v2344 = vsel %vm848, %v2197, 0
    %v2347 = vsel %vm848, %v2198, 0
    %2349 = vmatprep.subr.mxu0 0.0
    %2350 = vmatpush1.msra.mxu0 0.0
    %2351 = vmatprep.subr.mxu0 0.0
    %2352 = vmatpush1.msra.mxu0 0.0
    %2353 = vmatprep.subr.mxu0 0.0
    %2354 = vmatpush1.msra.mxu0 0.0
    %2355 = vmatprep.subr.mxu0 0.0
    %2356 = vmatpush1.msra.mxu0 0.0
    %2357 = vmatprep.subr.mxu0 0.0
    %2358 = vmatpush1.msra.mxu0 0.0
    %2359 = vmatprep.subr.mxu0 0.0
    %2360 = vmatpush1.msra.mxu0 0.0
    %2361 = vmatprep.subr.mxu0 0.0
    %2362 = vmatpush1.msra.mxu0 0.0
    %2363 = vmatprep.subr.mxu0 0.0
    %2364 = vmatpush1.msra.mxu0 0.0
    %2365 = vmatprep.subr.mxu0 0.0
    %2366 = vmatpush1.msra.mxu0 0.0
    %2367 = vmatprep.subr.mxu0 0.0
    %2368 = vmatpush1.msra.mxu0 0.0
    %2369 = vmatprep.subr.mxu0 0.0
    %2370 = vmatpush1.msra.mxu0 0.0
    %2371 = vmatprep.subr.mxu0 0.0
    %2372 = vmatpush1.msra.mxu0 0.0
    %2373 = vmatprep.subr.mxu0 0.0
    %2374 = vmatpush1.msra.mxu0 0.0
    %2375 = vmatprep.subr.mxu0 0.0
    %2376 = vmatpush1.msra.mxu0 0.0
    %2377 = vmatprep.subr.mxu0 0.0
    %2378 = vmatpush1.msra.mxu0 %v1838
    %2379 = vmatprep.subr.mxu0 0.0
    %2380 = vmatpush1.msra.mxu0 %v1837
    %2381 = vmatprep.subr.mxu0 0.0
    %2382 = vmatpush2.msra.mxu0 0.0
    %2383 = vmatprep.subr.mxu0 0.0
    %2384 = vmatpush2.msra.mxu0 0.0
    %2385 = vmatprep.subr.mxu0 0.0
    %2386 = vmatpush2.msra.mxu0 0.0
    %2387 = vmatprep.subr.mxu0 0.0
    %2388 = vmatpush2.msra.mxu0 0.0
    %2389 = vmatprep.subr.mxu0 0.0
    %2390 = vmatpush2.msra.mxu0 0.0
    %2391 = vmatprep.subr.mxu0 0.0
    %2392 = vmatpush2.msra.mxu0 0.0
    %2393 = vmatprep.subr.mxu0 0.0
    %2394 = vmatpush2.msra.mxu0 0.0
    %2395 = vmatprep.subr.mxu0 0.0
    %2396 = vmatpush2.msra.mxu0 0.0
    %2397 = vmatprep.subr.mxu0 0.0
    %2398 = vmatpush2.msra.mxu0 0.0
    %2399 = vmatprep.subr.mxu0 0.0
    %2400 = vmatpush2.msra.mxu0 0.0
    %2401 = vmatprep.subr.mxu0 0.0
    %2402 = vmatpush2.msra.mxu0 0.0
    %2403 = vmatprep.subr.mxu0 0.0
    %2404 = vmatpush2.msra.mxu0 0.0
    %2405 = vmatprep.subr.mxu0 0.0
    %2406 = vmatpush2.msra.mxu0 0.0
    %2407 = vmatprep.subr.mxu0 0.0
    %2408 = vmatpush2.msra.mxu0 0.0
    %2409 = vmatprep.subr.mxu0 0.0
    %2410 = vmatpush2.msra.mxu0 0.0
    %2411 = vmatprep.subr.mxu0 0.0
    %2412 = vmatpush2.msra.mxu0 0.0
    %2413 = vmatprep.mubr.f32.mxu0 0.0
    %2414 = vmatmul.mubr.f32.gmra.mxu0 %v2206
    %v2415 = vpop.f32.mrf.mxu0
    %v2416 = vadd.f32 %v2203, %v2415
    %v2417 = vpop.f32.mrf.mxu0
    %2418 = vmatprep.mubr.f32.mxu0 0.0
    %2419 = vmatmul.mubr.f32.gmra.mxu0 %v2209
    %v2420 = vpop.f32.mrf.mxu0
    %v2421 = vadd.f32 %v2203, %v2420
    %v2422 = vpop.f32.mrf.mxu0
    %2423 = vmatprep.mubr.f32.mxu0 0.0
    %2424 = vmatmul.mubr.f32.gmra.mxu0 %v2212
    %v2425 = vpop.f32.mrf.mxu0
    %v2426 = vadd.f32 %v2203, %v2425
    %v2427 = vpop.f32.mrf.mxu0
    %2428 = vmatprep.mubr.f32.mxu0 0.0
    %2429 = vmatmul.mubr.f32.gmra.mxu0 %v2215
    %v2430 = vpop.f32.mrf.mxu0
    %v2431 = vadd.f32 %v2203, %v2430
    %v2432 = vpop.f32.mrf.mxu0
    %2433 = vmatprep.mubr.f32.mxu0 0.0
    %2434 = vmatmul.mubr.f32.gmra.mxu0 %v2218
    %v2435 = vpop.f32.mrf.mxu0
    %v2436 = vadd.f32 %v2203, %v2435
    %v2437 = vpop.f32.mrf.mxu0
    %2438 = vmatprep.mubr.f32.mxu0 0.0
    %2439 = vmatmul.mubr.f32.gmra.mxu0 %v2221
    %v2440 = vpop.f32.mrf.mxu0
    %v2441 = vadd.f32 %v2203, %v2440
    %v2442 = vpop.f32.mrf.mxu0
    %2443 = vmatprep.mubr.f32.mxu0 0.0
    %2444 = vmatmul.mubr.f32.gmra.mxu0 %v2224
    %v2445 = vpop.f32.mrf.mxu0
    %v2446 = vadd.f32 %v2203, %v2445
    %v2447 = vpop.f32.mrf.mxu0
    %2448 = vmatprep.mubr.f32.mxu0 0.0
    %2449 = vmatmul.mubr.f32.gmra.mxu0 %v2227
    %v2450 = vpop.f32.mrf.mxu0
    %v2451 = vadd.f32 %v2203, %v2450
    %v2452 = vpop.f32.mrf.mxu0
    %2453 = vmatprep.mubr.f32.mxu0 0.0
    %2454 = vmatmul.mubr.f32.gmra.mxu0 %v2230
    %v2455 = vpop.f32.mrf.mxu0
    %v2456 = vadd.f32 %v2203, %v2455
    %v2457 = vpop.f32.mrf.mxu0
    %2458 = vmatprep.mubr.f32.mxu0 0.0
    %2459 = vmatmul.mubr.f32.gmra.mxu0 %v2233
    %v2460 = vpop.f32.mrf.mxu0
    %v2461 = vadd.f32 %v2203, %v2460
    %v2462 = vpop.f32.mrf.mxu0
    %2463 = vmatprep.mubr.f32.mxu0 0.0
    %2464 = vmatmul.mubr.f32.gmra.mxu0 %v2236
    %v2465 = vpop.f32.mrf.mxu0
    %v2466 = vadd.f32 %v2203, %v2465
    %v2467 = vpop.f32.mrf.mxu0
    %2468 = vmatprep.mubr.f32.mxu0 0.0
    %2469 = vmatmul.mubr.f32.gmra.mxu0 %v2239
    %v2470 = vpop.f32.mrf.mxu0
    %v2471 = vadd.f32 %v2203, %v2470
    %v2472 = vpop.f32.mrf.mxu0
    %2473 = vmatprep.mubr.f32.mxu0 0.0
    %2474 = vmatmul.mubr.f32.gmra.mxu0 %v2242
    %v2475 = vpop.f32.mrf.mxu0
    %v2476 = vadd.f32 %v2203, %v2475
    %v2477 = vpop.f32.mrf.mxu0
    %2478 = vmatprep.mubr.f32.mxu0 0.0
    %2479 = vmatmul.mubr.f32.gmra.mxu0 %v2245
    %v2480 = vpop.f32.mrf.mxu0
    %v2481 = vadd.f32 %v2203, %v2480
    %v2482 = vpop.f32.mrf.mxu0
    %2483 = vmatprep.mubr.f32.mxu0 0.0
    %2484 = vmatmul.mubr.f32.gmra.mxu0 %v2248
    %v2485 = vpop.f32.mrf.mxu0
    %v2486 = vadd.f32 %v2203, %v2485
    %v2487 = vpop.f32.mrf.mxu0
    %2488 = vmatprep.mubr.f32.mxu0 0.0
    %2489 = vmatmul.mubr.f32.gmra.mxu0 %v2251
    %v2490 = vpop.f32.mrf.mxu0
    %v2491 = vadd.f32 %v2203, %v2490
    %v2492 = vpop.f32.mrf.mxu0
    %2493 = vmatprep.mubr.f32.mxu0 0.0
    %2494 = vmatmul.mubr.f32.gmra.mxu0 %v2254
    %v2495 = vpop.f32.mrf.mxu0
    %v2496 = vadd.f32 %v2203, %v2495
    %v2497 = vpop.f32.mrf.mxu0
    %2498 = vmatprep.mubr.f32.mxu0 0.0
    %2499 = vmatmul.mubr.f32.gmra.mxu0 %v2257
    %v2500 = vpop.f32.mrf.mxu0
    %v2501 = vadd.f32 %v2203, %v2500
    %v2502 = vpop.f32.mrf.mxu0
    %2503 = vmatprep.mubr.f32.mxu0 0.0
    %2504 = vmatmul.mubr.f32.gmra.mxu0 %v2260
    %v2505 = vpop.f32.mrf.mxu0
    %v2506 = vadd.f32 %v2203, %v2505
    %v2507 = vpop.f32.mrf.mxu0
    %2508 = vmatprep.mubr.f32.mxu0 0.0
    %2509 = vmatmul.mubr.f32.gmra.mxu0 %v2263
    %v2510 = vpop.f32.mrf.mxu0
    %v2511 = vadd.f32 %v2203, %v2510
    %v2512 = vpop.f32.mrf.mxu0
    %2513 = vmatprep.mubr.f32.mxu0 0.0
    %2514 = vmatmul.mubr.f32.gmra.mxu0 %v2266
    %v2515 = vpop.f32.mrf.mxu0
    %v2516 = vadd.f32 %v2203, %v2515
    %v2517 = vpop.f32.mrf.mxu0
    %2518 = vmatprep.mubr.f32.mxu0 0.0
    %2519 = vmatmul.mubr.f32.gmra.mxu0 %v2269
    %v2520 = vpop.f32.mrf.mxu0
    %v2521 = vadd.f32 %v2203, %v2520
    %v2522 = vpop.f32.mrf.mxu0
    %2523 = vmatprep.mubr.f32.mxu0 0.0
    %2524 = vmatmul.mubr.f32.gmra.mxu0 %v2272
    %v2525 = vpop.f32.mrf.mxu0
    %v2526 = vadd.f32 %v2203, %v2525
    %v2527 = vpop.f32.mrf.mxu0
    %2528 = vmatprep.mubr.f32.mxu0 0.0
    %2529 = vmatmul.mubr.f32.gmra.mxu0 %v2275
    %v2530 = vpop.f32.mrf.mxu0
    %v2531 = vadd.f32 %v2203, %v2530
    %v2532 = vpop.f32.mrf.mxu0
    %2533 = vmatprep.mubr.f32.mxu0 0.0
    %2534 = vmatmul.mubr.f32.gmra.mxu0 %v2278
    %v2535 = vpop.f32.mrf.mxu0
    %v2536 = vadd.f32 %v2203, %v2535
    %v2537 = vpop.f32.mrf.mxu0
    %2538 = vmatprep.mubr.f32.mxu0 0.0
    %2539 = vmatmul.mubr.f32.gmra.mxu0 %v2281
    %v2540 = vpop.f32.mrf.mxu0
    %v2541 = vadd.f32 %v2203, %v2540
    %v2542 = vpop.f32.mrf.mxu0
    %2543 = vmatprep.mubr.f32.mxu0 0.0
    %2544 = vmatmul.mubr.f32.gmra.mxu0 %v2284
    %v2545 = vpop.f32.mrf.mxu0
    %v2546 = vadd.f32 %v2203, %v2545
    %v2547 = vpop.f32.mrf.mxu0
    %2548 = vmatprep.mubr.f32.mxu0 0.0
    %2549 = vmatmul.mubr.f32.gmra.mxu0 %v2287
    %v2550 = vpop.f32.mrf.mxu0
    %v2551 = vadd.f32 %v2203, %v2550
    %v2552 = vpop.f32.mrf.mxu0
    %2553 = vmatprep.mubr.f32.mxu0 0.0
    %2554 = vmatmul.mubr.f32.gmra.mxu0 %v2290
    %v2555 = vpop.f32.mrf.mxu0
    %v2556 = vadd.f32 %v2203, %v2555
    %v2557 = vpop.f32.mrf.mxu0
    %2558 = vmatprep.mubr.f32.mxu0 0.0
    %2559 = vmatmul.mubr.f32.gmra.mxu0 %v2293
    %v2560 = vpop.f32.mrf.mxu0
    %v2561 = vadd.f32 %v2203, %v2560
    %v2562 = vpop.f32.mrf.mxu0
    %2563 = vmatprep.mubr.f32.mxu0 0.0
    %2564 = vmatmul.mubr.f32.gmra.mxu0 %v2296
    %v2565 = vpop.f32.mrf.mxu0
    %v2566 = vadd.f32 %v2203, %v2565
    %v2567 = vpop.f32.mrf.mxu0
    %2568 = vmatprep.mubr.f32.mxu0 0.0
    %2569 = vmatmul.mubr.f32.gmra.mxu0 %v2299
    %v2570 = vpop.f32.mrf.mxu0
    %v2571 = vadd.f32 %v2203, %v2570
    %v2572 = vpop.f32.mrf.mxu0
    %2573 = vmatprep.mubr.f32.mxu0 0.0
    %2574 = vmatmul.mubr.f32.gmra.mxu0 %v2302
    %v2575 = vpop.f32.mrf.mxu0
    %v2576 = vadd.f32 %v2203, %v2575
    %v2577 = vpop.f32.mrf.mxu0
    %2578 = vmatprep.mubr.f32.mxu0 0.0
    %2579 = vmatmul.mubr.f32.gmra.mxu0 %v2305
    %v2580 = vpop.f32.mrf.mxu0
    %v2581 = vadd.f32 %v2203, %v2580
    %v2582 = vpop.f32.mrf.mxu0
    %2583 = vmatprep.mubr.f32.mxu0 0.0
    %2584 = vmatmul.mubr.f32.gmra.mxu0 %v2308
    %v2585 = vpop.f32.mrf.mxu0
    %v2586 = vadd.f32 %v2203, %v2585
    %v2587 = vpop.f32.mrf.mxu0
    %2588 = vmatprep.mubr.f32.mxu0 0.0
    %2589 = vmatmul.mubr.f32.gmra.mxu0 %v2311
    %v2590 = vpop.f32.mrf.mxu0
    %v2591 = vadd.f32 %v2203, %v2590
    %v2592 = vpop.f32.mrf.mxu0
    %2593 = vmatprep.mubr.f32.mxu0 0.0
    %2594 = vmatmul.mubr.f32.gmra.mxu0 %v2314
    %v2595 = vpop.f32.mrf.mxu0
    %v2596 = vadd.f32 %v2203, %v2595
    %v2597 = vpop.f32.mrf.mxu0
    %2598 = vmatprep.mubr.f32.mxu0 0.0
    %2599 = vmatmul.mubr.f32.gmra.mxu0 %v2317
    %v2600 = vpop.f32.mrf.mxu0
    %v2601 = vadd.f32 %v2203, %v2600
    %v2602 = vpop.f32.mrf.mxu0
    %2603 = vmatprep.mubr.f32.mxu0 0.0
    %2604 = vmatmul.mubr.f32.gmra.mxu0 %v2320
    %v2605 = vpop.f32.mrf.mxu0
    %v2606 = vadd.f32 %v2203, %v2605
    %v2607 = vpop.f32.mrf.mxu0
    %2608 = vmatprep.mubr.f32.mxu0 0.0
    %2609 = vmatmul.mubr.f32.gmra.mxu0 %v2323
    %v2610 = vpop.f32.mrf.mxu0
    %v2611 = vadd.f32 %v2203, %v2610
    %v2612 = vpop.f32.mrf.mxu0
    %2613 = vmatprep.mubr.f32.mxu0 0.0
    %2614 = vmatmul.mubr.f32.gmra.mxu0 %v2326
    %v2615 = vpop.f32.mrf.mxu0
    %v2616 = vadd.f32 %v2203, %v2615
    %v2617 = vpop.f32.mrf.mxu0
    %2618 = vmatprep.mubr.f32.mxu0 0.0
    %2619 = vmatmul.mubr.f32.gmra.mxu0 %v2329
    %v2620 = vpop.f32.mrf.mxu0
    %v2621 = vadd.f32 %v2203, %v2620
    %v2622 = vpop.f32.mrf.mxu0
    %2623 = vmatprep.mubr.f32.mxu0 0.0
    %2624 = vmatmul.mubr.f32.gmra.mxu0 %v2332
    %v2625 = vpop.f32.mrf.mxu0
    %v2626 = vadd.f32 %v2203, %v2625
    %v2627 = vpop.f32.mrf.mxu0
    %2628 = vmatprep.mubr.f32.mxu0 0.0
    %2629 = vmatmul.mubr.f32.gmra.mxu0 %v2335
    %v2630 = vpop.f32.mrf.mxu0
    %v2631 = vadd.f32 %v2203, %v2630
    %v2632 = vpop.f32.mrf.mxu0
    %2633 = vmatprep.mubr.f32.mxu0 0.0
    %2634 = vmatmul.mubr.f32.gmra.mxu0 %v2338
    %v2635 = vpop.f32.mrf.mxu0
    %v2636 = vadd.f32 %v2203, %v2635
    %v2637 = vpop.f32.mrf.mxu0
    %2638 = vmatprep.mubr.f32.mxu0 0.0
    %2639 = vmatmul.mubr.f32.gmra.mxu0 %v2341
    %v2640 = vpop.f32.mrf.mxu0
    %v2641 = vadd.f32 %v2203, %v2640
    %v2642 = vpop.f32.mrf.mxu0
    %2643 = vmatprep.mubr.f32.mxu0 0.0
    %2644 = vmatmul.mubr.f32.gmra.mxu0 %v2344
    %v2645 = vpop.f32.mrf.mxu0
    %v2646 = vadd.f32 %v2203, %v2645
    %v2647 = vpop.f32.mrf.mxu0
    %2648 = vmatprep.mubr.f32.mxu0 0.0
    %2649 = vmatmul.mubr.f32.gmra.mxu0 %v2347
    %v2650 = vpop.f32.mrf.mxu0
    %v2651 = vadd.f32 %v2203, %v2650
    %v2652 = vpop.f32.mrf.mxu0
    %2653 = vdwg.mxu0
    %2654 = vmax.xlane.f32.xlu0 %v2416
    %v2655 = vpop.xlane.xlu0 %2654
    %2656 = vmax.xlane.f32.xlu0 %v2421
    %v2657 = vpop.xlane.xlu0 %2656
    %2658 = vmax.xlane.f32.xlu0 %v2426
    %v2659 = vpop.xlane.xlu0 %2658
    %2660 = vmax.xlane.f32.xlu0 %v2431
    %v2661 = vpop.xlane.xlu0 %2660
    %2662 = vmax.xlane.f32.xlu0 %v2436
    %v2663 = vpop.xlane.xlu0 %2662
    %2664 = vmax.xlane.f32.xlu0 %v2441
    %v2665 = vpop.xlane.xlu0 %2664
    %2666 = vmax.xlane.f32.xlu0 %v2446
    %v2667 = vpop.xlane.xlu0 %2666
    %2668 = vmax.xlane.f32.xlu0 %v2451
    %v2669 = vpop.xlane.xlu0 %2668
    %2670 = vmax.xlane.f32.xlu0 %v2456
    %v2671 = vpop.xlane.xlu0 %2670
    %2672 = vmax.xlane.f32.xlu0 %v2461
    %v2673 = vpop.xlane.xlu0 %2672
    %2674 = vmax.xlane.f32.xlu0 %v2466
    %v2675 = vpop.xlane.xlu0 %2674
    %2676 = vmax.xlane.f32.xlu0 %v2471
    %v2677 = vpop.xlane.xlu0 %2676
    %2678 = vmax.xlane.f32.xlu0 %v2476
    %v2679 = vpop.xlane.xlu0 %2678
    %2680 = vmax.xlane.f32.xlu0 %v2481
    %v2681 = vpop.xlane.xlu0 %2680
    %2682 = vmax.xlane.f32.xlu0 %v2486
    %v2683 = vpop.xlane.xlu0 %2682
    %2684 = vmax.xlane.f32.xlu0 %v2491
    %v2685 = vpop.xlane.xlu0 %2684
    %2686 = vmax.xlane.f32.xlu0 %v2496
    %v2687 = vpop.xlane.xlu0 %2686
    %2688 = vmax.xlane.f32.xlu0 %v2501
    %v2689 = vpop.xlane.xlu0 %2688
    %2690 = vmax.xlane.f32.xlu0 %v2506
    %v2691 = vpop.xlane.xlu0 %2690
    %2692 = vmax.xlane.f32.xlu0 %v2511
    %v2693 = vpop.xlane.xlu0 %2692
    %2694 = vmax.xlane.f32.xlu0 %v2516
    %v2695 = vpop.xlane.xlu0 %2694
    %2696 = vmax.xlane.f32.xlu0 %v2521
    %v2697 = vpop.xlane.xlu0 %2696
    %2698 = vmax.xlane.f32.xlu0 %v2526
    %v2699 = vpop.xlane.xlu0 %2698
    %2700 = vmax.xlane.f32.xlu0 %v2531
    %v2701 = vpop.xlane.xlu0 %2700
    %2702 = vmax.xlane.f32.xlu0 %v2536
    %v2703 = vpop.xlane.xlu0 %2702
    %2704 = vmax.xlane.f32.xlu0 %v2541
    %v2705 = vpop.xlane.xlu0 %2704
    %2706 = vmax.xlane.f32.xlu0 %v2546
    %v2707 = vpop.xlane.xlu0 %2706
    %2708 = vmax.xlane.f32.xlu0 %v2551
    %v2709 = vpop.xlane.xlu0 %2708
    %2710 = vmax.xlane.f32.xlu0 %v2556
    %v2711 = vpop.xlane.xlu0 %2710
    %2712 = vmax.xlane.f32.xlu0 %v2561
    %v2713 = vpop.xlane.xlu0 %2712
    %2714 = vmax.xlane.f32.xlu0 %v2566
    %v2715 = vpop.xlane.xlu0 %2714
    %2716 = vmax.xlane.f32.xlu0 %v2571
    %v2717 = vpop.xlane.xlu0 %2716
    %2718 = vmax.xlane.f32.xlu0 %v2576
    %v2719 = vpop.xlane.xlu0 %2718
    %2720 = vmax.xlane.f32.xlu0 %v2581
    %v2721 = vpop.xlane.xlu0 %2720
    %2722 = vmax.xlane.f32.xlu0 %v2586
    %v2723 = vpop.xlane.xlu0 %2722
    %2724 = vmax.xlane.f32.xlu0 %v2591
    %v2725 = vpop.xlane.xlu0 %2724
    %2726 = vmax.xlane.f32.xlu0 %v2596
    %v2727 = vpop.xlane.xlu0 %2726
    %2728 = vmax.xlane.f32.xlu0 %v2601
    %v2729 = vpop.xlane.xlu0 %2728
    %2730 = vmax.xlane.f32.xlu0 %v2606
    %v2731 = vpop.xlane.xlu0 %2730
    %2732 = vmax.xlane.f32.xlu0 %v2611
    %v2733 = vpop.xlane.xlu0 %2732
    %2734 = vmax.xlane.f32.xlu0 %v2616
    %v2735 = vpop.xlane.xlu0 %2734
    %2736 = vmax.xlane.f32.xlu0 %v2621
    %v2737 = vpop.xlane.xlu0 %2736
    %2738 = vmax.xlane.f32.xlu0 %v2626
    %v2739 = vpop.xlane.xlu0 %2738
    %2740 = vmax.xlane.f32.xlu0 %v2631
    %v2741 = vpop.xlane.xlu0 %2740
    %2742 = vmax.xlane.f32.xlu0 %v2636
    %v2743 = vpop.xlane.xlu0 %2742
    %2744 = vmax.xlane.f32.xlu0 %v2641
    %v2745 = vpop.xlane.xlu0 %2744
    %2746 = vmax.xlane.f32.xlu0 %v2646
    %v2747 = vpop.xlane.xlu0 %2746
    %2748 = vmax.xlane.f32.xlu0 %v2651
    %v2749 = vpop.xlane.xlu0 %2748
    %v2750 = vsub.f32 %v2416, %v2655
    %v2751 = vsub.f32 %v2421, %v2657
    %v2752 = vsub.f32 %v2426, %v2659
    %v2753 = vsub.f32 %v2431, %v2661
    %v2754 = vsub.f32 %v2436, %v2663
    %v2755 = vsub.f32 %v2441, %v2665
    %v2756 = vsub.f32 %v2446, %v2667
    %v2757 = vsub.f32 %v2451, %v2669
    %v2758 = vsub.f32 %v2456, %v2671
    %v2759 = vsub.f32 %v2461, %v2673
    %v2760 = vsub.f32 %v2466, %v2675
    %v2761 = vsub.f32 %v2471, %v2677
    %v2762 = vsub.f32 %v2476, %v2679
    %v2763 = vsub.f32 %v2481, %v2681
    %v2764 = vsub.f32 %v2486, %v2683
    %v2765 = vsub.f32 %v2491, %v2685
    %v2766 = vsub.f32 %v2496, %v2687
    %v2767 = vsub.f32 %v2501, %v2689
    %v2768 = vsub.f32 %v2506, %v2691
    %v2769 = vsub.f32 %v2511, %v2693
    %v2770 = vsub.f32 %v2516, %v2695
    %v2771 = vsub.f32 %v2521, %v2697
    %v2772 = vsub.f32 %v2526, %v2699
    %v2773 = vsub.f32 %v2531, %v2701
    %v2774 = vsub.f32 %v2536, %v2703
    %v2775 = vsub.f32 %v2541, %v2705
    %v2776 = vsub.f32 %v2546, %v2707
    %v2777 = vsub.f32 %v2551, %v2709
    %v2778 = vsub.f32 %v2556, %v2711
    %v2779 = vsub.f32 %v2561, %v2713
    %v2780 = vsub.f32 %v2566, %v2715
    %v2781 = vsub.f32 %v2571, %v2717
    %v2782 = vsub.f32 %v2576, %v2719
    %v2783 = vsub.f32 %v2581, %v2721
    %v2784 = vsub.f32 %v2586, %v2723
    %v2785 = vsub.f32 %v2591, %v2725
    %v2786 = vsub.f32 %v2596, %v2727
    %v2787 = vsub.f32 %v2601, %v2729
    %v2788 = vsub.f32 %v2606, %v2731
    %v2789 = vsub.f32 %v2611, %v2733
    %v2790 = vsub.f32 %v2616, %v2735
    %v2791 = vsub.f32 %v2621, %v2737
    %v2792 = vsub.f32 %v2626, %v2739
    %v2793 = vsub.f32 %v2631, %v2741
    %v2794 = vsub.f32 %v2636, %v2743
    %v2795 = vsub.f32 %v2641, %v2745
    %v2796 = vsub.f32 %v2646, %v2747
    %v2797 = vsub.f32 %v2651, %v2749
    %v2798 = vmul.f32 %v2750, 1.442695
    %v2799 = vpow.pop %v2798
    %v2800 = vmul.f32 %v2751, 1.442695
    %v2801 = vpow.pop %v2800
    %v2802 = vmul.f32 %v2752, 1.442695
    %v2803 = vpow.pop %v2802
    %v2804 = vmul.f32 %v2753, 1.442695
    %v2805 = vpow.pop %v2804
    %v2806 = vmul.f32 %v2754, 1.442695
    %v2807 = vpow.pop %v2806
    %v2808 = vmul.f32 %v2755, 1.442695
    %v2809 = vpow.pop %v2808
    %v2810 = vmul.f32 %v2756, 1.442695
    %v2811 = vpow.pop %v2810
    %v2812 = vmul.f32 %v2757, 1.442695
    %v2813 = vpow.pop %v2812
    %v2814 = vmul.f32 %v2758, 1.442695
    %v2815 = vpow.pop %v2814
    %v2816 = vmul.f32 %v2759, 1.442695
    %v2817 = vpow.pop %v2816
    %v2818 = vmul.f32 %v2760, 1.442695
    %v2819 = vpow.pop %v2818
    %v2820 = vmul.f32 %v2761, 1.442695
    %v2821 = vpow.pop %v2820
    %v2822 = vmul.f32 %v2762, 1.442695
    %v2823 = vpow.pop %v2822
    %v2824 = vmul.f32 %v2763, 1.442695
    %v2825 = vpow.pop %v2824
    %v2826 = vmul.f32 %v2764, 1.442695
    %v2827 = vpow.pop %v2826
    %v2828 = vmul.f32 %v2765, 1.442695
    %v2829 = vpow.pop %v2828
    %v2830 = vmul.f32 %v2766, 1.442695
    %v2831 = vpow.pop %v2830
    %v2832 = vmul.f32 %v2767, 1.442695
    %v2833 = vpow.pop %v2832
    %v2834 = vmul.f32 %v2768, 1.442695
    %v2835 = vpow.pop %v2834
    %v2836 = vmul.f32 %v2769, 1.442695
    %v2837 = vpow.pop %v2836
    %v2838 = vmul.f32 %v2770, 1.442695
    %v2839 = vpow.pop %v2838
    %v2840 = vmul.f32 %v2771, 1.442695
    %v2841 = vpow.pop %v2840
    %v2842 = vmul.f32 %v2772, 1.442695
    %v2843 = vpow.pop %v2842
    %v2844 = vmul.f32 %v2773, 1.442695
    %v2845 = vpow.pop %v2844
    %v2846 = vmul.f32 %v2774, 1.442695
    %v2847 = vpow.pop %v2846
    %v2848 = vmul.f32 %v2775, 1.442695
    %v2849 = vpow.pop %v2848
    %v2850 = vmul.f32 %v2776, 1.442695
    %v2851 = vpow.pop %v2850
    %v2852 = vmul.f32 %v2777, 1.442695
    %v2853 = vpow.pop %v2852
    %v2854 = vmul.f32 %v2778, 1.442695
    %v2855 = vpow.pop %v2854
    %v2856 = vmul.f32 %v2779, 1.442695
    %v2857 = vpow.pop %v2856
    %v2858 = vmul.f32 %v2780, 1.442695
    %v2859 = vpow.pop %v2858
    %v2860 = vmul.f32 %v2781, 1.442695
    %v2861 = vpow.pop %v2860
    %v2862 = vmul.f32 %v2782, 1.442695
    %v2863 = vpow.pop %v2862
    %v2864 = vmul.f32 %v2783, 1.442695
    %v2865 = vpow.pop %v2864
    %v2866 = vmul.f32 %v2784, 1.442695
    %v2867 = vpow.pop %v2866
    %v2868 = vmul.f32 %v2785, 1.442695
    %v2869 = vpow.pop %v2868
    %v2870 = vmul.f32 %v2786, 1.442695
    %v2871 = vpow.pop %v2870
    %v2872 = vmul.f32 %v2787, 1.442695
    %v2873 = vpow.pop %v2872
    %v2874 = vmul.f32 %v2788, 1.442695
    %v2875 = vpow.pop %v2874
    %v2876 = vmul.f32 %v2789, 1.442695
    %v2877 = vpow.pop %v2876
    %v2878 = vmul.f32 %v2790, 1.442695
    %v2879 = vpow.pop %v2878
    %v2880 = vmul.f32 %v2791, 1.442695
    %v2881 = vpow.pop %v2880
    %v2882 = vmul.f32 %v2792, 1.442695
    %v2883 = vpow.pop %v2882
    %v2884 = vmul.f32 %v2793, 1.442695
    %v2885 = vpow.pop %v2884
    %v2886 = vmul.f32 %v2794, 1.442695
    %v2887 = vpow.pop %v2886
    %v2888 = vmul.f32 %v2795, 1.442695
    %v2889 = vpow.pop %v2888
    %v2890 = vmul.f32 %v2796, 1.442695
    %v2891 = vpow.pop %v2890
    %v2892 = vmul.f32 %v2797, 1.442695
    %v2893 = vpow.pop %v2892
    %2894 = vadd.xlane.f32.xlu0 %v2799
    %v2895 = vpop.xlane.xlu0 %2894
    %2896 = vadd.xlane.f32.xlu0 %v2801
    %v2897 = vpop.xlane.xlu0 %2896
    %2898 = vadd.xlane.f32.xlu0 %v2803
    %v2899 = vpop.xlane.xlu0 %2898
    %2900 = vadd.xlane.f32.xlu0 %v2805
    %v2901 = vpop.xlane.xlu0 %2900
    %2902 = vadd.xlane.f32.xlu0 %v2807
    %v2903 = vpop.xlane.xlu0 %2902
    %2904 = vadd.xlane.f32.xlu0 %v2809
    %v2905 = vpop.xlane.xlu0 %2904
    %2906 = vadd.xlane.f32.xlu0 %v2811
    %v2907 = vpop.xlane.xlu0 %2906
    %2908 = vadd.xlane.f32.xlu0 %v2813
    %v2909 = vpop.xlane.xlu0 %2908
    %2910 = vadd.xlane.f32.xlu0 %v2815
    %v2911 = vpop.xlane.xlu0 %2910
    %2912 = vadd.xlane.f32.xlu0 %v2817
    %v2913 = vpop.xlane.xlu0 %2912
    %2914 = vadd.xlane.f32.xlu0 %v2819
    %v2915 = vpop.xlane.xlu0 %2914
    %2916 = vadd.xlane.f32.xlu0 %v2821
    %v2917 = vpop.xlane.xlu0 %2916
    %2918 = vadd.xlane.f32.xlu0 %v2823
    %v2919 = vpop.xlane.xlu0 %2918
    %2920 = vadd.xlane.f32.xlu0 %v2825
    %v2921 = vpop.xlane.xlu0 %2920
    %2922 = vadd.xlane.f32.xlu0 %v2827
    %v2923 = vpop.xlane.xlu0 %2922
    %2924 = vadd.xlane.f32.xlu0 %v2829
    %v2925 = vpop.xlane.xlu0 %2924
    %2926 = vadd.xlane.f32.xlu0 %v2831
    %v2927 = vpop.xlane.xlu0 %2926
    %2928 = vadd.xlane.f32.xlu0 %v2833
    %v2929 = vpop.xlane.xlu0 %2928
    %2930 = vadd.xlane.f32.xlu0 %v2835
    %v2931 = vpop.xlane.xlu0 %2930
    %2932 = vadd.xlane.f32.xlu0 %v2837
    %v2933 = vpop.xlane.xlu0 %2932
    %2934 = vadd.xlane.f32.xlu0 %v2839
    %v2935 = vpop.xlane.xlu0 %2934
    %2936 = vadd.xlane.f32.xlu0 %v2841
    %v2937 = vpop.xlane.xlu0 %2936
    %2938 = vadd.xlane.f32.xlu0 %v2843
    %v2939 = vpop.xlane.xlu0 %2938
    %2940 = vadd.xlane.f32.xlu0 %v2845
    %v2941 = vpop.xlane.xlu0 %2940
    %2942 = vadd.xlane.f32.xlu0 %v2847
    %v2943 = vpop.xlane.xlu0 %2942
    %2944 = vadd.xlane.f32.xlu0 %v2849
    %v2945 = vpop.xlane.xlu0 %2944
    %2946 = vadd.xlane.f32.xlu0 %v2851
    %v2947 = vpop.xlane.xlu0 %2946
    %2948 = vadd.xlane.f32.xlu0 %v2853
    %v2949 = vpop.xlane.xlu0 %2948
    %2950 = vadd.xlane.f32.xlu0 %v2855
    %v2951 = vpop.xlane.xlu0 %2950
    %2952 = vadd.xlane.f32.xlu0 %v2857
    %v2953 = vpop.xlane.xlu0 %2952
    %2954 = vadd.xlane.f32.xlu0 %v2859
    %v2955 = vpop.xlane.xlu0 %2954
    %2956 = vadd.xlane.f32.xlu0 %v2861
    %v2957 = vpop.xlane.xlu0 %2956
    %2958 = vadd.xlane.f32.xlu0 %v2863
    %v2959 = vpop.xlane.xlu0 %2958
    %2960 = vadd.xlane.f32.xlu0 %v2865
    %v2961 = vpop.xlane.xlu0 %2960
    %2962 = vadd.xlane.f32.xlu0 %v2867
    %v2963 = vpop.xlane.xlu0 %2962
    %2964 = vadd.xlane.f32.xlu0 %v2869
    %v2965 = vpop.xlane.xlu0 %2964
    %2966 = vadd.xlane.f32.xlu0 %v2871
    %v2967 = vpop.xlane.xlu0 %2966
    %2968 = vadd.xlane.f32.xlu0 %v2873
    %v2969 = vpop.xlane.xlu0 %2968
    %2970 = vadd.xlane.f32.xlu0 %v2875
    %v2971 = vpop.xlane.xlu0 %2970
    %2972 = vadd.xlane.f32.xlu0 %v2877
    %v2973 = vpop.xlane.xlu0 %2972
    %2974 = vadd.xlane.f32.xlu0 %v2879
    %v2975 = vpop.xlane.xlu0 %2974
    %2976 = vadd.xlane.f32.xlu0 %v2881
    %v2977 = vpop.xlane.xlu0 %2976
    %2978 = vadd.xlane.f32.xlu0 %v2883
    %v2979 = vpop.xlane.xlu0 %2978
    %2980 = vadd.xlane.f32.xlu0 %v2885
    %v2981 = vpop.xlane.xlu0 %2980
    %2982 = vadd.xlane.f32.xlu0 %v2887
    %v2983 = vpop.xlane.xlu0 %2982
    %2984 = vadd.xlane.f32.xlu0 %v2889
    %v2985 = vpop.xlane.xlu0 %2984
    %2986 = vadd.xlane.f32.xlu0 %v2891
    %v2987 = vpop.xlane.xlu0 %2986
    %2988 = vadd.xlane.f32.xlu0 %v2893
    %v2989 = vpop.xlane.xlu0 %2988
    %v2990 = vlog2.pop %v2895
    %v2991 = vmul.f32 %v2990, 0.6931472
    %v2992 = vlog2.pop %v2897
    %v2993 = vmul.f32 %v2992, 0.6931472
    %v2994 = vlog2.pop %v2899
    %v2995 = vmul.f32 %v2994, 0.6931472
    %v2996 = vlog2.pop %v2901
    %v2997 = vmul.f32 %v2996, 0.6931472
    %v2998 = vlog2.pop %v2903
    %v2999 = vmul.f32 %v2998, 0.6931472
    %v3000 = vlog2.pop %v2905
    %v3001 = vmul.f32 %v3000, 0.6931472
    %v3002 = vlog2.pop %v2907
    %v3003 = vmul.f32 %v3002, 0.6931472
    %v3004 = vlog2.pop %v2909
    %v3005 = vmul.f32 %v3004, 0.6931472
    %v3006 = vlog2.pop %v2911
    %v3007 = vmul.f32 %v3006, 0.6931472
    %v3008 = vlog2.pop %v2913
    %v3009 = vmul.f32 %v3008, 0.6931472
    %v3010 = vlog2.pop %v2915
    %v3011 = vmul.f32 %v3010, 0.6931472
    %v3012 = vlog2.pop %v2917
    %v3013 = vmul.f32 %v3012, 0.6931472
    %v3014 = vlog2.pop %v2919
    %v3015 = vmul.f32 %v3014, 0.6931472
    %v3016 = vlog2.pop %v2921
    %v3017 = vmul.f32 %v3016, 0.6931472
    %v3018 = vlog2.pop %v2923
    %v3019 = vmul.f32 %v3018, 0.6931472
    %v3020 = vlog2.pop %v2925
    %v3021 = vmul.f32 %v3020, 0.6931472
    %v3022 = vlog2.pop %v2927
    %v3023 = vmul.f32 %v3022, 0.6931472
    %v3024 = vlog2.pop %v2929
    %v3025 = vmul.f32 %v3024, 0.6931472
    %v3026 = vlog2.pop %v2931
    %v3027 = vmul.f32 %v3026, 0.6931472
    %v3028 = vlog2.pop %v2933
    %v3029 = vmul.f32 %v3028, 0.6931472
    %v3030 = vlog2.pop %v2935
    %v3031 = vmul.f32 %v3030, 0.6931472
    %v3032 = vlog2.pop %v2937
    %v3033 = vmul.f32 %v3032, 0.6931472
    %v3034 = vlog2.pop %v2939
    %v3035 = vmul.f32 %v3034, 0.6931472
    %v3036 = vlog2.pop %v2941
    %v3037 = vmul.f32 %v3036, 0.6931472
    %v3038 = vlog2.pop %v2943
    %v3039 = vmul.f32 %v3038, 0.6931472
    %v3040 = vlog2.pop %v2945
    %v3041 = vmul.f32 %v3040, 0.6931472
    %v3042 = vlog2.pop %v2947
    %v3043 = vmul.f32 %v3042, 0.6931472
    %v3044 = vlog2.pop %v2949
    %v3045 = vmul.f32 %v3044, 0.6931472
    %v3046 = vlog2.pop %v2951
    %v3047 = vmul.f32 %v3046, 0.6931472
    %v3048 = vlog2.pop %v2953
    %v3049 = vmul.f32 %v3048, 0.6931472
    %v3050 = vlog2.pop %v2955
    %v3051 = vmul.f32 %v3050, 0.6931472
    %v3052 = vlog2.pop %v2957
    %v3053 = vmul.f32 %v3052, 0.6931472
    %v3054 = vlog2.pop %v2959
    %v3055 = vmul.f32 %v3054, 0.6931472
    %v3056 = vlog2.pop %v2961
    %v3057 = vmul.f32 %v3056, 0.6931472
    %v3058 = vlog2.pop %v2963
    %v3059 = vmul.f32 %v3058, 0.6931472
    %v3060 = vlog2.pop %v2965
    %v3061 = vmul.f32 %v3060, 0.6931472
    %v3062 = vlog2.pop %v2967
    %v3063 = vmul.f32 %v3062, 0.6931472
    %v3064 = vlog2.pop %v2969
    %v3065 = vmul.f32 %v3064, 0.6931472
    %v3066 = vlog2.pop %v2971
    %v3067 = vmul.f32 %v3066, 0.6931472
    %v3068 = vlog2.pop %v2973
    %v3069 = vmul.f32 %v3068, 0.6931472
    %v3070 = vlog2.pop %v2975
    %v3071 = vmul.f32 %v3070, 0.6931472
    %v3072 = vlog2.pop %v2977
    %v3073 = vmul.f32 %v3072, 0.6931472
    %v3074 = vlog2.pop %v2979
    %v3075 = vmul.f32 %v3074, 0.6931472
    %v3076 = vlog2.pop %v2981
    %v3077 = vmul.f32 %v3076, 0.6931472
    %v3078 = vlog2.pop %v2983
    %v3079 = vmul.f32 %v3078, 0.6931472
    %v3080 = vlog2.pop %v2985
    %v3081 = vmul.f32 %v3080, 0.6931472
    %v3082 = vlog2.pop %v2987
    %v3083 = vmul.f32 %v3082, 0.6931472
    %v3084 = vlog2.pop %v2989
    %v3085 = vmul.f32 %v3084, 0.6931472
    %v3086 = vsub.f32 %v2750, %v2991
    %v3087 = vsub.f32 %v2751, %v2993
    %v3088 = vsub.f32 %v2752, %v2995
    %v3089 = vsub.f32 %v2753, %v2997
    %v3090 = vsub.f32 %v2754, %v2999
    %v3091 = vsub.f32 %v2755, %v3001
    %v3092 = vsub.f32 %v2756, %v3003
    %v3093 = vsub.f32 %v2757, %v3005
    %v3094 = vsub.f32 %v2758, %v3007
    %v3095 = vsub.f32 %v2759, %v3009
    %v3096 = vsub.f32 %v2760, %v3011
    %v3097 = vsub.f32 %v2761, %v3013
    %v3098 = vsub.f32 %v2762, %v3015
    %v3099 = vsub.f32 %v2763, %v3017
    %v3100 = vsub.f32 %v2764, %v3019
    %v3101 = vsub.f32 %v2765, %v3021
    %v3102 = vsub.f32 %v2766, %v3023
    %v3103 = vsub.f32 %v2767, %v3025
    %v3104 = vsub.f32 %v2768, %v3027
    %v3105 = vsub.f32 %v2769, %v3029
    %v3106 = vsub.f32 %v2770, %v3031
    %v3107 = vsub.f32 %v2771, %v3033
    %v3108 = vsub.f32 %v2772, %v3035
    %v3109 = vsub.f32 %v2773, %v3037
    %v3110 = vsub.f32 %v2774, %v3039
    %v3111 = vsub.f32 %v2775, %v3041
    %v3112 = vsub.f32 %v2776, %v3043
    %v3113 = vsub.f32 %v2777, %v3045
    %v3114 = vsub.f32 %v2778, %v3047
    %v3115 = vsub.f32 %v2779, %v3049
    %v3116 = vsub.f32 %v2780, %v3051
    %v3117 = vsub.f32 %v2781, %v3053
    %v3118 = vsub.f32 %v2782, %v3055
    %v3119 = vsub.f32 %v2783, %v3057
    %v3120 = vsub.f32 %v2784, %v3059
    %v3121 = vsub.f32 %v2785, %v3061
    %v3122 = vsub.f32 %v2786, %v3063
    %v3123 = vsub.f32 %v2787, %v3065
    %v3124 = vsub.f32 %v2788, %v3067
    %v3125 = vsub.f32 %v2789, %v3069
    %v3126 = vsub.f32 %v2790, %v3071
    %v3127 = vsub.f32 %v2791, %v3073
    %v3128 = vsub.f32 %v2792, %v3075
    %v3129 = vsub.f32 %v2793, %v3077
    %v3130 = vsub.f32 %v2794, %v3079
    %v3131 = vsub.f32 %v2795, %v3081
    %v3132 = vsub.f32 %v2796, %v3083
    %v3133 = vsub.f32 %v2797, %v3085
    %3134 = vst [vmem:[#allocation2] sm:$0xff] %v3086
    %3135 = vst [vmem:[#allocation2 + $0x8] sm:$0xff] %v3087
    %3136 = vst [vmem:[#allocation2 + $0x10] sm:$0xff] %v3088
    %3137 = vst [vmem:[#allocation2 + $0x18] sm:$0xff] %v3089
    %3138 = vst [vmem:[#allocation2 + $0x20] sm:$0xff] %v3090
    %3139 = vst [vmem:[#allocation2 + $0x28] sm:$0xff] %v3091
    %3140 = vst [vmem:[#allocation2 + $0x30] sm:$0xff] %v3092
    %3141 = vst [vmem:[#allocation2 + $0x38] sm:$0xff] %v3093
    %3142 = vst [vmem:[#allocation2 + $0x40] sm:$0xff] %v3094
    %3143 = vst [vmem:[#allocation2 + $0x48] sm:$0xff] %v3095
    %3144 = vst [vmem:[#allocation2 + $0x50] sm:$0xff] %v3096
    %3145 = vst [vmem:[#allocation2 + $0x58] sm:$0xff] %v3097
    %3146 = vst [vmem:[#allocation2 + $0x60] sm:$0xff] %v3098
    %3147 = vst [vmem:[#allocation2 + $0x68] sm:$0xff] %v3099
    %3148 = vst [vmem:[#allocation2 + $0x70] sm:$0xff] %v3100
    %3149 = vst [vmem:[#allocation2 + $0x78] sm:$0xff] %v3101
    %3150 = vst [vmem:[#allocation2 + $0x80] sm:$0xff] %v3102
    %3151 = vst [vmem:[#allocation2 + $0x88] sm:$0xff] %v3103
    %3152 = vst [vmem:[#allocation2 + $0x90] sm:$0xff] %v3104
    %3153 = vst [vmem:[#allocation2 + $0x98] sm:$0xff] %v3105
    %3154 = vst [vmem:[#allocation2 + $0xa0] sm:$0xff] %v3106
    %3155 = vst [vmem:[#allocation2 + $0xa8] sm:$0xff] %v3107
    %3156 = vst [vmem:[#allocation2 + $0xb0] sm:$0xff] %v3108
    %3157 = vst [vmem:[#allocation2 + $0xb8] sm:$0xff] %v3109
    %3158 = vst [vmem:[#allocation2 + $0xc0] sm:$0xff] %v3110
    %3159 = vst [vmem:[#allocation2 + $0xc8] sm:$0xff] %v3111
    %3160 = vst [vmem:[#allocation2 + $0xd0] sm:$0xff] %v3112
    %3161 = vst [vmem:[#allocation2 + $0xd8] sm:$0xff] %v3113
    %3162 = vst [vmem:[#allocation2 + $0xe0] sm:$0xff] %v3114
    %3163 = vst [vmem:[#allocation2 + $0xe8] sm:$0xff] %v3115
    %3164 = vst [vmem:[#allocation2 + $0xf0] sm:$0xff] %v3116
    %3165 = vst [vmem:[#allocation2 + $0xf8] sm:$0xff] %v3117
    %3166 = vst [vmem:[#allocation2 + $0x100] sm:$0xff] %v3118
    %3167 = vst [vmem:[#allocation2 + $0x108] sm:$0xff] %v3119
    %3168 = vst [vmem:[#allocation2 + $0x110] sm:$0xff] %v3120
    %3169 = vst [vmem:[#allocation2 + $0x118] sm:$0xff] %v3121
    %3170 = vst [vmem:[#allocation2 + $0x120] sm:$0xff] %v3122
    %3171 = vst [vmem:[#allocation2 + $0x128] sm:$0xff] %v3123
    %3172 = vst [vmem:[#allocation2 + $0x130] sm:$0xff] %v3124
    %3173 = vst [vmem:[#allocation2 + $0x138] sm:$0xff] %v3125
    %3174 = vst [vmem:[#allocation2 + $0x140] sm:$0xff] %v3126
    %3175 = vst [vmem:[#allocation2 + $0x148] sm:$0xff] %v3127
    %3176 = vst [vmem:[#allocation2 + $0x150] sm:$0xff] %v3128
    %3177 = vst [vmem:[#allocation2 + $0x158] sm:$0xff] %v3129
    %3178 = vst [vmem:[#allocation2 + $0x160] sm:$0xff] %v3130
    %3179 = vst [vmem:[#allocation2 + $0x168] sm:$0xff] %v3131
    %3180 = vst [vmem:[#allocation2 + $0x170] sm:$0xff] %v3132
    %3181 = vst [vmem:[#allocation2 + $0x178] sm:$0xff] %v3133
    // Predicated region
    $region38: #{tpu_custom_call.1} parent=1 // pred_check
      _
    $region39: #{tpu_custom_call.1} parent=1 // pred_check_branch
      %3183 = sbr.rel (0) target = $region41
    $region40: #{tpu_custom_call.1} parent=1 // pred_region
      %s3185 = ssub.s32 6144, 6144
      %3186 = vsyncadd [#allocation3], %s3185
      %s3187 = sshll.u32 [#allocation2], 4
      %s3188 = int_to_ptr.vmem [resolvable:$true] %s3187
      %3193 = dma.vmem_to_hbm [thread:$0]  %s3188, 6144, %s9, [#allocation3], 128, 128, 8
    $region41: #{tpu_custom_call.1} parent=1 // pred_fallthru
      _
    // Predicated region
    $region42: #{tpu_custom_call.1} parent=1 // pred_check
      _
    $region43: #{tpu_custom_call.1} parent=1 // pred_check_branch
      %3195 = sbr.rel (0) target = $region45
    $region44: #{tpu_custom_call.1} parent=1 // pred_region
      %3196 = dma.done [#allocation3], 6144
    $region45: #{tpu_custom_call.1} parent=1 // pred_fallthru
      _
    %3197 = vsyncpa [#allocation3], 1

</llo_original>
